<compile_context>
chip_gen: v7x
topology: tpu7x:2x2x1
jax: 0.10.0
libtpu: 0.0.40
codegen_flags: <defaults>
</compile_context>

<pallas_src>
import functools

import jax
import jax.numpy as jnp
from jax.experimental import pallas as pl
from jax.experimental.pallas import tpu as pltpu


def _round_up(n, m):
    return (n + m - 1) // m * m


def _pick_proj_rows(n_pad):
    """Largest multiple of 8 that divides n_pad and is <= 1024 (or n_pad itself)."""
    if n_pad <= 1024:
        return n_pad
    best, m = 8, 8
    while m <= 1024:
        if n_pad % m == 0:
            best = m
        m += 8
    return best


# ---------------------------------------------------------------------------
# Kernel 1: feature projection  h = x @ W   (large row strips, MXU)
# ---------------------------------------------------------------------------
def project_kernel(x_ref, w_ref, h_ref):
    h_ref[...] = jnp.dot(x_ref[...], w_ref[...],
                         preferred_element_type=jnp.float32)


def gat_project(x, w, *, block_rows):
    n_pad, f_in = x.shape
    hc = w.shape[1]
    est = 2 * (block_rows * f_in * 4 + block_rows * hc * 4) + 2 * f_in * hc * 4
    vmem_limit = int(min(max(est * 2, 32 * 1024 * 1024), 128 * 1024 * 1024))
    return pl.pallas_call(
        project_kernel,
        out_shape=jax.ShapeDtypeStruct((n_pad, hc), jnp.float32),
        grid=(n_pad // block_rows,),
        in_specs=[
            pl.BlockSpec((block_rows, f_in), lambda i: (i, 0)),  # x strip
            pl.BlockSpec((f_in, hc), lambda i: (0, 0)),          # W (resident)
        ],
        out_specs=pl.BlockSpec((block_rows, hc), lambda i: (i, 0)),
        compiler_params=pltpu.CompilerParams(
            dimension_semantics=("parallel",),
            vmem_limit_bytes=vmem_limit),
    )(x, w)


# ---------------------------------------------------------------------------
# Kernel 2: masked softmax attention + aggregation, transposed orientation.
#   Sources live on the sublane axis (Np), targets of the current strip on the
#   lane axis (TM).  Softmax reduces over axis 0; the aggregation matmul is
#   [C, Np] (bf16) @ [Np, TM] (bf16) -> [C, TM] f32 (lane-dense MXU shape).
# ---------------------------------------------------------------------------
def attn_kernel(ssrc_ref, ht_ref, adj_ref, sdstt_ref, bias_ref, out_ref,
                *, heads, out_ch, concat, apply_elu):
    """ssrc:[Np,H] f32, ht:[H*C,Np] bf16, adj:[1,Np,TM] int8,
       sdstt:[1,H,TM] f32, bias:[out_dim,1] f32 -> out:[1,out_dim,TM] f32."""
    mask = adj_ref[0] != 0                 # [Np, TM] bool, computed once per strip
    ssrc = ssrc_ref[...]                   # [Np, H]
    sdst_t = sdstt_ref[0]                  # [H, TM]
    ht = ht_ref[...]                       # [H*C, Np] bf16 (resident)

    outs = []
    for hd in range(heads):
        # e[s, t] = s_src[s] + s_dst[t]  (PyG: alpha_src[src] + alpha_dst[dst])
        e = ssrc[:, hd:hd + 1] + sdst_t[hd:hd + 1, :]          # [Np, TM] f32
        e = jnp.maximum(e, 0.2 * e)                            # LeakyReLU(0.2)
        e = jnp.where(mask, e, -1e30)                          # int8 mask, no f32 mask buffer
        m = jnp.max(e, axis=0, keepdims=True)                  # [1, TM] f32
        p = jnp.exp(e - m)                                     # masked entries underflow to 0
        denom = jnp.sum(p, axis=0, keepdims=True)              # [1, TM] f32 (>=1: self-loops)
        hh_t = ht[hd * out_ch:(hd + 1) * out_ch, :]            # [C, Np] bf16, sublane slice
        out_t = jnp.dot(hh_t, p.astype(jnp.bfloat16),          # bf16 MXU, f32 accumulate
                        preferred_element_type=jnp.float32)    # [C, TM]
        outs.append(out_t * pl.reciprocal(denom, approx=True)) # fold softmax denom (EUP)

    if concat:
        res = jnp.concatenate(outs, axis=0)                    # [H*C, TM] (clean 8-row chunks)
    else:
        res = outs[0]
        for o in outs[1:]:
            res = res + o
        res = res * (1.0 / heads)

    res = res + bias_ref[...]                                  # [out_dim,1] bcast over lanes
    if apply_elu:
        res = jnp.where(res > 0, res, jnp.exp(jnp.minimum(res, 0.0)) - 1.0)
    out_ref[0] = res                                           # single lane-dense store


def gat_attention(s_src, h_t, adj_tiled, s_dst_t_tiled, bias_col, *,
                  heads, out_ch, concat, apply_elu, tm, n_strips):
    hc, n_pad = h_t.shape
    out_dim = hc if concat else out_ch
    kernel = functools.partial(attn_kernel, heads=heads, out_ch=out_ch,
                               concat=concat, apply_elu=apply_elu)
    # VMEM footprint estimate: double-buffered ins/outs + live [Np,TM] temporaries.
    est = (2 * n_pad * tm                     # int8 adjacency strips
           + 2 * heads * tm * 4               # s_dst^T strips
           + 2 * hc * n_pad * 2               # resident h^T (bf16)
           + 2 * n_pad * heads * 4            # resident s_src
           + 2 * out_dim * tm * 4             # output strips
           + 6 * n_pad * tm * 4)              # e / p / mask live set
    vmem_limit = int(min(max(est * 2, 32 * 1024 * 1024), 128 * 1024 * 1024))
    return pl.pallas_call(
        kernel,
        out_shape=jax.ShapeDtypeStruct((n_strips, out_dim, tm), jnp.float32),
        grid=(n_strips,),
        in_specs=[
            pl.BlockSpec((n_pad, heads), lambda i: (0, 0)),      # s_src (resident)
            pl.BlockSpec((hc, n_pad), lambda i: (0, 0)),         # h^T bf16 (resident)
            pl.BlockSpec((1, n_pad, tm), lambda i: (i, 0, 0)),   # int8 adjacency strip
            pl.BlockSpec((1, heads, tm), lambda i: (i, 0, 0)),   # s_dst^T strip
            pl.BlockSpec((out_dim, 1), lambda i: (0, 0)),        # bias (resident)
        ],
        out_specs=pl.BlockSpec((1, out_dim, tm), lambda i: (i, 0, 0)),
        compiler_params=pltpu.CompilerParams(
            dimension_semantics=("parallel",),
            vmem_limit_bytes=vmem_limit),
    )(s_src, h_t, adj_tiled, s_dst_t_tiled, bias_col)


# ---------------------------------------------------------------------------
# Layer / model glue (plain XLA: tiny einsums + layout plumbing only)
# ---------------------------------------------------------------------------
def gat_conv(x, adj_tiled, w, att_src, att_dst, bias, *, heads, out_ch,
             concat, apply_elu, tm, n_strips, proj_rows):
    n_pad = x.shape[0]
    out_dim = heads * out_ch if concat else out_ch

    h = gat_project(x, w, block_rows=proj_rows)                 # [Np, H*C] f32

    # Per-node attention logits (tiny; computed in XLA, not as lane-sparse Pallas outputs).
    h3 = h.reshape(n_pad, heads, out_ch)
    s_src = jnp.einsum('nhc,hc->nh', h3, att_src)               # [Np, H]
    s_dst = jnp.einsum('nhc,hc->nh', h3, att_dst)               # [Np, H]
    s_dst_t_tiled = s_dst.T.reshape(heads, n_strips, tm).transpose(1, 0, 2)
    h_t = h.T.astype(jnp.bfloat16)                              # [H*C, Np] bf16 resident

    out_t_tiled = gat_attention(s_src, h_t, adj_tiled, s_dst_t_tiled,
                                bias.reshape(out_dim, 1),
                                heads=heads, out_ch=out_ch, concat=concat,
                                apply_elu=apply_elu, tm=tm, n_strips=n_strips)
    # [n_strips, out_dim, TM] -> [Np, out_dim]
    return out_t_tiled.transpose(0, 2, 1).reshape(n_pad, out_dim)


def build_adjacency_t(edge_index, num_nodes, padded_nodes):
    """Dense int8 adjacency [source, target] with self-loops (PyG default).

    Note: duplicate edges collapse to a single 1; padded rows/cols stay zero.
    """
    adj = jnp.zeros((padded_nodes, padded_nodes), jnp.int8)
    adj = adj.at[edge_index[0], edge_index[1]].set(1)
    idx = jnp.arange(num_nodes)
    adj = adj.at[idx, idx].set(1)
    return adj


def gat_forward(x, edge_index, params, config, *, block_rows=128):
    """Eval-mode forward of the GAT module (all dropouts are identity)."""
    n, f_in = x.shape

    # Row-strip size: multiple of 32 (int8 sublane tile) and such that the row
    # grid has >= 2 strips whenever the graph allows it (v7x dual-TC sharding).
    tm = _round_up(max(32, block_rows), 32)
    if n > 32 and tm > _round_up(n, 32) // 2:
        tm = max(32, (_round_up(n, 32) // 2) // 32 * 32)
    n_pad = _round_up(n, tm)
    n_strips = n_pad // tm
    proj_rows = _pick_proj_rows(n_pad)      # projection uses much larger strips

    x_p = jnp.zeros((n_pad, f_in), jnp.float32).at[:n].set(x)
    adj = build_adjacency_t(edge_index, n, n_pad)
    # Pre-tile adjacency so each [Np, TM] strip is a contiguous int8 DMA.
    adj_tiled = adj.reshape(n_pad, n_strips, tm).transpose(1, 0, 2)

    # x = F.dropout(x, 0.6) -> identity (eval); ELU fused into layer-1 kernel.
    h = gat_conv(x_p, adj_tiled,
                 params['w1'], params['att_src1'], params['att_dst1'], params['b1'],
                 heads=config['gat_n_heads'], out_ch=config['gat_nhid'],
                 concat=True, apply_elu=True,
                 tm=tm, n_strips=n_strips, proj_rows=proj_rows)
    # x = F.dropout(x, 0.6) -> identity (eval)
    out = gat_conv(h, adj_tiled,
                   params['w2'], params['att_src2'], params['att_dst2'], params['b2'],
                   heads=config['gat_n_out_heads'], out_ch=config['gnn_outdim'],
                   concat=False, apply_elu=False,
                   tm=tm, n_strips=n_strips, proj_rows=proj_rows)
    return out[:n]


def init_params(key, config):
    f_in = config['gnn_indim']
    c1, h1 = config['gat_nhid'], config['gat_n_heads']
    c2, h2 = config['gnn_outdim'], config['gat_n_out_heads']
    ks = jax.random.split(key, 6)

    def glorot(k, shape):
        fan_in, fan_out = shape[0], shape[-1]
        lim = (6.0 / (fan_in + fan_out)) ** 0.5
        return jax.random.uniform(k, shape, jnp.float32, -lim, lim)

    return {
        'w1': glorot(ks[0], (f_in, h1 * c1)),
        'att_src1': glorot(ks[1], (h1, c1)),
        'att_dst1': glorot(ks[2], (h1, c1)),
        'b1': jnp.zeros((h1 * c1,), jnp.float32),
        'w2': glorot(ks[3], (h1 * c1, h2 * c2)),
        'att_src2': glorot(ks[4], (h2, c2)),
        'att_dst2': glorot(ks[5], (h2, c2)),
        'b2': jnp.zeros((c2,), jnp.float32),
    }


if __name__ == "__main__":
    config = {
        'gnn_indim': 16,
        'gat_nhid': 8,
        'gat_n_heads': 4,
        'gnn_outdim': 8,
        'gat_n_out_heads': 1,
        'gat_attndrop': 0.6,   # eval mode -> identity
    }
    N, E = 64, 192

    key = jax.random.PRNGKey(0)
    k_x, k_src, k_dst, k_p = jax.random.split(key, 4)

    x = jax.random.normal(k_x, (N, config['gnn_indim']), jnp.float32)
    src = jax.random.randint(k_src, (E,), 0, N)
    dst = jax.random.randint(k_dst, (E,), 0, N)
    edge_index = jnp.stack([src, dst], axis=0)     # [2, E]

    params = init_params(k_p, config)

    # block_rows=32 -> 2 row strips: exercises the pipelined / parallel grid
    # even at demo size.
    fwd = jax.jit(lambda xx, ei, pp: gat_forward(xx, ei, pp, config, block_rows=32))
    out = fwd(x, edge_index, params)
    out = jax.block_until_ready(out)

    assert out.shape == (N, config['gnn_outdim'])
    assert bool(jnp.all(jnp.isfinite(out)))
    print("KERNEL_OK")
</pallas_src>

<mosaic_0001>
module attributes {stable_mosaic.version = 11 : i64} {
  func.func @project_kernel(%arg0: i32, %arg1: memref<64x16xf32, #tpu.memory_space<vmem>>, %arg2: memref<16x32xf32, #tpu.memory_space<vmem>>, %arg3: memref<64x32xf32, #tpu.memory_space<vmem>>) attributes {dimension_semantics = [#tpu.dimension_semantics<parallel>], iteration_bounds = array<i64: 1>, scalar_prefetch = 0 : i64, scratch_operands = 0 : i64, tpu.core_type = #tpu.core_type<tc>, window_params = [{transform_indices = @transform_0, window_bounds = array<i64: 64, 16>}, {pipeline_mode = #tpu.pipeline_mode<synchronous>, transform_indices = @transform_1, window_bounds = array<i64: 16, 32>}, {transform_indices = @transform_2, window_bounds = array<i64: 64, 32>}]} {
    %c0 = arith.constant 0 : index
    %c0_0 = arith.constant 0 : index
    %0 = vector.load %arg1[%c0, %c0_0] : memref<64x16xf32, #tpu.memory_space<vmem>>, vector<64x16xf32>
    %c0_1 = arith.constant 0 : index
    %c0_2 = arith.constant 0 : index
    %1 = vector.load %arg2[%c0_1, %c0_2] : memref<16x32xf32, #tpu.memory_space<vmem>>, vector<16x32xf32>
    %cst = arith.constant dense<0.000000e+00> : vector<64x32xf32>
    %2 = tpu.matmul %0, %1, %cst {dimension_numbers = #tpu.dot_dimension_numbers<[1], [0], [0], [1], [0, 0, 1, 1], [], []>} : vector<64x16xf32>, vector<16x32xf32>, vector<64x32xf32> -> vector<64x32xf32>
    %c0_3 = arith.constant 0 : index
    %c0_4 = arith.constant 0 : index
    %3 = vector.load %arg3[%c0_3, %c0_4] : memref<64x32xf32, #tpu.memory_space<vmem>>, vector<64x32xf32>
    tpu.vector_store %arg3[%c0_3, %c0_4], %2 {strides = array<i32>} : memref<64x32xf32, #tpu.memory_space<vmem>>, vector<64x32xf32>,
    return
  }
  func.func @transform_0(%arg0: i32) -> (i32, i32) {
    %c0_i32 = arith.constant 0 : i32
    %c0_i32_0 = arith.constant 0 : i32
    return %arg0, %c0_i32 : i32, i32
  }
  func.func @transform_1(%arg0: i32) -> (i32, i32) {
    %c0_i32 = arith.constant 0 : i32
    %c0_i32_0 = arith.constant 0 : i32
    %c0_i32_1 = arith.constant 0 : i32
    return %c0_i32, %c0_i32_0 : i32, i32
  }
  func.func @transform_2(%arg0: i32) -> (i32, i32) {
    %c0_i32 = arith.constant 0 : i32
    %c0_i32_0 = arith.constant 0 : i32
    return %arg0, %c0_i32 : i32, i32
  }
}

module attributes {stable_mosaic.version = 11 : i64} {
  func.func @attn_kernel(%arg0: i32, %arg1: memref<64x4xf32, #tpu.memory_space<vmem>>, %arg2: memref<32x64xbf16, #tpu.memory_space<vmem>>, %arg3: memref<1x64x32xi8, #tpu.memory_space<vmem>>, %arg4: memref<1x4x32xf32, #tpu.memory_space<vmem>>, %arg5: memref<32x1xf32, #tpu.memory_space<vmem>>, %arg6: memref<1x32x32xf32, #tpu.memory_space<vmem>>) attributes {dimension_semantics = [#tpu.dimension_semantics<parallel>], iteration_bounds = array<i64: 2>, scalar_prefetch = 0 : i64, scratch_operands = 0 : i64, tpu.core_type = #tpu.core_type<tc>, window_params = [{pipeline_mode = #tpu.pipeline_mode<synchronous>, transform_indices = @transform_0, window_bounds = array<i64: 64, 4>}, {pipeline_mode = #tpu.pipeline_mode<synchronous>, transform_indices = @transform_1, window_bounds = array<i64: 32, 64>}, {transform_indices = @transform_2, window_bounds = array<i64: 1, 64, 32>}, {transform_indices = @transform_3, window_bounds = array<i64: 1, 4, 32>}, {pipeline_mode = #tpu.pipeline_mode<synchronous>, transform_indices = @transform_4, window_bounds = array<i64: 32, 1>}, {transform_indices = @transform_5, window_bounds = array<i64: 1, 32, 32>}]} {
    %c0 = arith.constant 0 : index
    %c0_0 = arith.constant 0 : index
    %c0_1 = arith.constant 0 : index
    %0 = vector.load %arg3[%c0, %c0_0, %c0_1] : memref<1x64x32xi8, #tpu.memory_space<vmem>>, vector<1x64x32xi8>
    %1 = vector.shape_cast %0 : vector<1x64x32xi8> to vector<64x32xi8>
    %c0_i8 = arith.constant 0 : i8
    %2 = vector.broadcast %c0_i8 : i8 to vector<64x32xi8>
    %3 = arith.cmpi ne, %1, %2 : vector<64x32xi8>
    %c0_2 = arith.constant 0 : index
    %c0_3 = arith.constant 0 : index
    %4 = vector.load %arg1[%c0_2, %c0_3] : memref<64x4xf32, #tpu.memory_space<vmem>>, vector<64x4xf32>
    %c0_4 = arith.constant 0 : index
    %c0_5 = arith.constant 0 : index
    %c0_6 = arith.constant 0 : index
    %5 = vector.load %arg4[%c0_4, %c0_5, %c0_6] : memref<1x4x32xf32, #tpu.memory_space<vmem>>, vector<1x4x32xf32>
    %6 = vector.shape_cast %5 : vector<1x4x32xf32> to vector<4x32xf32>
    %c0_7 = arith.constant 0 : index
    %c0_8 = arith.constant 0 : index
    %7 = vector.load %arg2[%c0_7, %c0_8] : memref<32x64xbf16, #tpu.memory_space<vmem>>, vector<32x64xbf16>
    %8 = vector.extract_strided_slice %4 {offsets = [0, 0], sizes = [64, 1], strides = [1, 1]} : vector<64x4xf32> to vector<64x1xf32>
    %9 = vector.extract_strided_slice %6 {offsets = [0, 0], sizes = [1, 32], strides = [1, 1]} : vector<4x32xf32> to vector<1x32xf32>
    %10 = vector.broadcast %8 : vector<64x1xf32> to vector<64x32xf32>
    %11 = vector.broadcast %9 : vector<1x32xf32> to vector<64x32xf32>
    %12 = arith.addf %10, %11 : vector<64x32xf32>
    %cst = arith.constant 2.000000e-01 : f32
    %13 = vector.broadcast %cst : f32 to vector<64x32xf32>
    %14 = arith.mulf %13, %12 : vector<64x32xf32>
    %15 = arith.maximumf %12, %14 : vector<64x32xf32>
    %cst_9 = arith.constant -1.000000e+30 : f32
    %16 = vector.broadcast %cst_9 : f32 to vector<64x32xf32>
    %17 = arith.select %3, %15, %16 : vector<64x32xi1>, vector<64x32xf32>
    %cst_10 = arith.constant dense<0xFF800000> : vector<32xf32>
    %18 = vector.multi_reduction <maximumf>, %17, %cst_10 [0] : vector<64x32xf32> to vector<32xf32>
    %19 = vector.shape_cast %18 : vector<32xf32> to vector<1x32xf32>
    %20 = vector.broadcast %19 : vector<1x32xf32> to vector<64x32xf32>
    %21 = arith.subf %17, %20 : vector<64x32xf32>
    %22 = math.exp %21 : vector<64x32xf32>
    %cst_11 = arith.constant dense<0.000000e+00> : vector<32xf32>
    %23 = vector.multi_reduction <add>, %22, %cst_11 [0] : vector<64x32xf32> to vector<32xf32>
    %24 = vector.shape_cast %23 : vector<32xf32> to vector<1x32xf32>
    %25 = vector.extract_strided_slice %7 {offsets = [0, 0], sizes = [8, 64], strides = [1, 1]} : vector<32x64xbf16> to vector<8x64xbf16>
    %26 = arith.truncf %22 : vector<64x32xf32> to vector<64x32xbf16>
    %cst_12 = arith.constant dense<0.000000e+00> : vector<8x32xf32>
    %27 = tpu.matmul %25, %26, %cst_12 {dimension_numbers = #tpu.dot_dimension_numbers<[1], [0], [0], [1], [0, 0, 1, 1], [], []>} : vector<8x64xbf16>, vector<64x32xbf16>, vector<8x32xf32> -> vector<8x32xf32>
    %28 = tpu.reciprocal %24 {approx = true} : vector<1x32xf32> -> vector<1x32xf32>
    %29 = vector.broadcast %28 : vector<1x32xf32> to vector<8x32xf32>
    %30 = arith.mulf %27, %29 : vector<8x32xf32>
    %31 = vector.extract_strided_slice %4 {offsets = [0, 1], sizes = [64, 1], strides = [1, 1]} : vector<64x4xf32> to vector<64x1xf32>
    %32 = vector.extract_strided_slice %6 {offsets = [1, 0], sizes = [1, 32], strides = [1, 1]} : vector<4x32xf32> to vector<1x32xf32>
    %33 = vector.broadcast %31 : vector<64x1xf32> to vector<64x32xf32>
    %34 = vector.broadcast %32 : vector<1x32xf32> to vector<64x32xf32>
    %35 = arith.addf %33, %34 : vector<64x32xf32>
    %cst_13 = arith.constant 2.000000e-01 : f32
    %36 = vector.broadcast %cst_13 : f32 to vector<64x32xf32>
    %37 = arith.mulf %36, %35 : vector<64x32xf32>
    %38 = arith.maximumf %35, %37 : vector<64x32xf32>
    %cst_14 = arith.constant -1.000000e+30 : f32
    %39 = vector.broadcast %cst_14 : f32 to vector<64x32xf32>
    %40 = arith.select %3, %38, %39 : vector<64x32xi1>, vector<64x32xf32>
    %cst_15 = arith.constant dense<0xFF800000> : vector<32xf32>
    %41 = vector.multi_reduction <maximumf>, %40, %cst_15 [0] : vector<64x32xf32> to vector<32xf32>
    %42 = vector.shape_cast %41 : vector<32xf32> to vector<1x32xf32>
    %43 = vector.broadcast %42 : vector<1x32xf32> to vector<64x32xf32>
    %44 = arith.subf %40, %43 : vector<64x32xf32>
    %45 = math.exp %44 : vector<64x32xf32>
    %cst_16 = arith.constant dense<0.000000e+00> : vector<32xf32>
    %46 = vector.multi_reduction <add>, %45, %cst_16 [0] : vector<64x32xf32> to vector<32xf32>
    %47 = vector.shape_cast %46 : vector<32xf32> to vector<1x32xf32>
    %48 = vector.extract_strided_slice %7 {offsets = [8, 0], sizes = [8, 64], strides = [1, 1]} : vector<32x64xbf16> to vector<8x64xbf16>
    %49 = arith.truncf %45 : vector<64x32xf32> to vector<64x32xbf16>
    %cst_17 = arith.constant dense<0.000000e+00> : vector<8x32xf32>
    %50 = tpu.matmul %48, %49, %cst_17 {dimension_numbers = #tpu.dot_dimension_numbers<[1], [0], [0], [1], [0, 0, 1, 1], [], []>} : vector<8x64xbf16>, vector<64x32xbf16>, vector<8x32xf32> -> vector<8x32xf32>
    %51 = tpu.reciprocal %47 {approx = true} : vector<1x32xf32> -> vector<1x32xf32>
    %52 = vector.broadcast %51 : vector<1x32xf32> to vector<8x32xf32>
    %53 = arith.mulf %50, %52 : vector<8x32xf32>
    %54 = vector.extract_strided_slice %4 {offsets = [0, 2], sizes = [64, 1], strides = [1, 1]} : vector<64x4xf32> to vector<64x1xf32>
    %55 = vector.extract_strided_slice %6 {offsets = [2, 0], sizes = [1, 32], strides = [1, 1]} : vector<4x32xf32> to vector<1x32xf32>
    %56 = vector.broadcast %54 : vector<64x1xf32> to vector<64x32xf32>
    %57 = vector.broadcast %55 : vector<1x32xf32> to vector<64x32xf32>
    %58 = arith.addf %56, %57 : vector<64x32xf32>
    %cst_18 = arith.constant 2.000000e-01 : f32
    %59 = vector.broadcast %cst_18 : f32 to vector<64x32xf32>
    %60 = arith.mulf %59, %58 : vector<64x32xf32>
    %61 = arith.maximumf %58, %60 : vector<64x32xf32>
    %cst_19 = arith.constant -1.000000e+30 : f32
    %62 = vector.broadcast %cst_19 : f32 to vector<64x32xf32>
    %63 = arith.select %3, %61, %62 : vector<64x32xi1>, vector<64x32xf32>
    %cst_20 = arith.constant dense<0xFF800000> : vector<32xf32>
    %64 = vector.multi_reduction <maximumf>, %63, %cst_20 [0] : vector<64x32xf32> to vector<32xf32>
    %65 = vector.shape_cast %64 : vector<32xf32> to vector<1x32xf32>
    %66 = vector.broadcast %65 : vector<1x32xf32> to vector<64x32xf32>
    %67 = arith.subf %63, %66 : vector<64x32xf32>
    %68 = math.exp %67 : vector<64x32xf32>
    %cst_21 = arith.constant dense<0.000000e+00> : vector<32xf32>
    %69 = vector.multi_reduction <add>, %68, %cst_21 [0] : vector<64x32xf32> to vector<32xf32>
    %70 = vector.shape_cast %69 : vector<32xf32> to vector<1x32xf32>
    %71 = vector.extract_strided_slice %7 {offsets = [16, 0], sizes = [8, 64], strides = [1, 1]} : vector<32x64xbf16> to vector<8x64xbf16>
    %72 = arith.truncf %68 : vector<64x32xf32> to vector<64x32xbf16>
    %cst_22 = arith.constant dense<0.000000e+00> : vector<8x32xf32>
    %73 = tpu.matmul %71, %72, %cst_22 {dimension_numbers = #tpu.dot_dimension_numbers<[1], [0], [0], [1], [0, 0, 1, 1], [], []>} : vector<8x64xbf16>, vector<64x32xbf16>, vector<8x32xf32> -> vector<8x32xf32>
    %74 = tpu.reciprocal %70 {approx = true} : vector<1x32xf32> -> vector<1x32xf32>
    %75 = vector.broadcast %74 : vector<1x32xf32> to vector<8x32xf32>
    %76 = arith.mulf %73, %75 : vector<8x32xf32>
    %77 = vector.extract_strided_slice %4 {offsets = [0, 3], sizes = [64, 1], strides = [1, 1]} : vector<64x4xf32> to vector<64x1xf32>
    %78 = vector.extract_strided_slice %6 {offsets = [3, 0], sizes = [1, 32], strides = [1, 1]} : vector<4x32xf32> to vector<1x32xf32>
    %79 = vector.broadcast %77 : vector<64x1xf32> to vector<64x32xf32>
    %80 = vector.broadcast %78 : vector<1x32xf32> to vector<64x32xf32>
    %81 = arith.addf %79, %80 : vector<64x32xf32>
    %cst_23 = arith.constant 2.000000e-01 : f32
    %82 = vector.broadcast %cst_23 : f32 to vector<64x32xf32>
    %83 = arith.mulf %82, %81 : vector<64x32xf32>
    %84 = arith.maximumf %81, %83 : vector<64x32xf32>
    %cst_24 = arith.constant -1.000000e+30 : f32
    %85 = vector.broadcast %cst_24 : f32 to vector<64x32xf32>
    %86 = arith.select %3, %84, %85 : vector<64x32xi1>, vector<64x32xf32>
    %cst_25 = arith.constant dense<0xFF800000> : vector<32xf32>
    %87 = vector.multi_reduction <maximumf>, %86, %cst_25 [0] : vector<64x32xf32> to vector<32xf32>
    %88 = vector.shape_cast %87 : vector<32xf32> to vector<1x32xf32>
    %89 = vector.broadcast %88 : vector<1x32xf32> to vector<64x32xf32>
    %90 = arith.subf %86, %89 : vector<64x32xf32>
    %91 = math.exp %90 : vector<64x32xf32>
    %cst_26 = arith.constant dense<0.000000e+00> : vector<32xf32>
    %92 = vector.multi_reduction <add>, %91, %cst_26 [0] : vector<64x32xf32> to vector<32xf32>
    %93 = vector.shape_cast %92 : vector<32xf32> to vector<1x32xf32>
    %94 = vector.extract_strided_slice %7 {offsets = [24, 0], sizes = [8, 64], strides = [1, 1]} : vector<32x64xbf16> to vector<8x64xbf16>
    %95 = arith.truncf %91 : vector<64x32xf32> to vector<64x32xbf16>
    %cst_27 = arith.constant dense<0.000000e+00> : vector<8x32xf32>
    %96 = tpu.matmul %94, %95, %cst_27 {dimension_numbers = #tpu.dot_dimension_numbers<[1], [0], [0], [1], [0, 0, 1, 1], [], []>} : vector<8x64xbf16>, vector<64x32xbf16>, vector<8x32xf32> -> vector<8x32xf32>
    %97 = tpu.reciprocal %93 {approx = true} : vector<1x32xf32> -> vector<1x32xf32>
    %98 = vector.broadcast %97 : vector<1x32xf32> to vector<8x32xf32>
    %99 = arith.mulf %96, %98 : vector<8x32xf32>
    %100 = tpu.concatenate %30, %53, %76, %99 in 0 : vector<8x32xf32>, vector<8x32xf32>, vector<8x32xf32>, vector<8x32xf32> -> vector<32x32xf32>
    %c0_28 = arith.constant 0 : index
    %c0_29 = arith.constant 0 : index
    %101 = vector.load %arg5[%c0_28, %c0_29] : memref<32x1xf32, #tpu.memory_space<vmem>>, vector<32x1xf32>
    %102 = vector.broadcast %101 : vector<32x1xf32> to vector<32x32xf32>
    %103 = arith.addf %100, %102 : vector<32x32xf32>
    %cst_30 = arith.constant 0.000000e+00 : f32
    %104 = vector.broadcast %cst_30 : f32 to vector<32x32xf32>
    %105 = arith.cmpf ogt, %103, %104 : vector<32x32xf32>
    %cst_31 = arith.constant 0.000000e+00 : f32
    %106 = vector.broadcast %cst_31 : f32 to vector<32x32xf32>
    %107 = arith.minimumf %103, %106 : vector<32x32xf32>
    %108 = math.exp %107 : vector<32x32xf32>
    %cst_32 = arith.constant 1.000000e+00 : f32
    %109 = vector.broadcast %cst_32 : f32 to vector<32x32xf32>
    %110 = arith.subf %108, %109 : vector<32x32xf32>
    %111 = arith.select %105, %103, %110 : vector<32x32xi1>, vector<32x32xf32>
    %c0_33 = arith.constant 0 : index
    %c0_34 = arith.constant 0 : index
    %c0_35 = arith.constant 0 : index
    %112 = vector.load %arg6[%c0_33, %c0_34, %c0_35] : memref<1x32x32xf32, #tpu.memory_space<vmem>>, vector<1x32x32xf32>
    %113 = vector.shape_cast %112 : vector<1x32x32xf32> to vector<32x32xf32>
    %114 = vector.shape_cast %111 : vector<32x32xf32> to vector<1x32x32xf32>
    tpu.vector_store %arg6[%c0_33, %c0_34, %c0_35], %114 {strides = array<i32>} : memref<1x32x32xf32, #tpu.memory_space<vmem>>, vector<1x32x32xf32>,
    return
  }
  func.func @transform_0(%arg0: i32) -> (i32, i32) {
    %c0_i32 = arith.constant 0 : i32
    %c0_i32_0 = arith.constant 0 : i32
    %c0_i32_1 = arith.constant 0 : i32
    return %c0_i32, %c0_i32_0 : i32, i32
  }
  func.func @transform_1(%arg0: i32) -> (i32, i32) {
    %c0_i32 = arith.constant 0 : i32
    %c0_i32_0 = arith.constant 0 : i32
    %c0_i32_1 = arith.constant 0 : i32
    return %c0_i32, %c0_i32_0 : i32, i32
  }
  func.func @transform_2(%arg0: i32) -> (i32, i32, i32) {
    %c0_i32 = arith.constant 0 : i32
    %c0_i32_0 = arith.constant 0 : i32
    %c0_i32_1 = arith.constant 0 : i32
    return %arg0, %c0_i32, %c0_i32_0 : i32, i32, i32
  }
  func.func @transform_3(%arg0: i32) -> (i32, i32, i32) {
    %c0_i32 = arith.constant 0 : i32
    %c0_i32_0 = arith.constant 0 : i32
    %c0_i32_1 = arith.constant 0 : i32
    return %arg0, %c0_i32, %c0_i32_0 : i32, i32, i32
  }
  func.func @transform_4(%arg0: i32) -> (i32, i32) {
    %c0_i32 = arith.constant 0 : i32
    %c0_i32_0 = arith.constant 0 : i32
    %c0_i32_1 = arith.constant 0 : i32
    return %c0_i32, %c0_i32_0 : i32, i32
  }
  func.func @transform_5(%arg0: i32) -> (i32, i32, i32) {
    %c0_i32 = arith.constant 0 : i32
    %c0_i32_0 = arith.constant 0 : i32
    %c0_i32_1 = arith.constant 0 : i32
    return %arg0, %c0_i32, %c0_i32_0 : i32, i32, i32
  }
}

module attributes {stable_mosaic.version = 11 : i64} {
  func.func @project_kernel(%arg0: i32, %arg1: memref<64x32xf32, #tpu.memory_space<vmem>>, %arg2: memref<32x8xf32, #tpu.memory_space<vmem>>, %arg3: memref<64x8xf32, #tpu.memory_space<vmem>>) attributes {dimension_semantics = [#tpu.dimension_semantics<parallel>], iteration_bounds = array<i64: 1>, scalar_prefetch = 0 : i64, scratch_operands = 0 : i64, tpu.core_type = #tpu.core_type<tc>, window_params = [{transform_indices = @transform_0, window_bounds = array<i64: 64, 32>}, {pipeline_mode = #tpu.pipeline_mode<synchronous>, transform_indices = @transform_1, window_bounds = array<i64: 32, 8>}, {transform_indices = @transform_2, window_bounds = array<i64: 64, 8>}]} {
    %c0 = arith.constant 0 : index
    %c0_0 = arith.constant 0 : index
    %0 = vector.load %arg1[%c0, %c0_0] : memref<64x32xf32, #tpu.memory_space<vmem>>, vector<64x32xf32>
    %c0_1 = arith.constant 0 : index
    %c0_2 = arith.constant 0 : index
    %1 = vector.load %arg2[%c0_1, %c0_2] : memref<32x8xf32, #tpu.memory_space<vmem>>, vector<32x8xf32>
    %cst = arith.constant dense<0.000000e+00> : vector<64x8xf32>
    %2 = tpu.matmul %0, %1, %cst {dimension_numbers = #tpu.dot_dimension_numbers<[1], [0], [0], [1], [0, 0, 1, 1], [], []>} : vector<64x32xf32>, vector<32x8xf32>, vector<64x8xf32> -> vector<64x8xf32>
    %c0_3 = arith.constant 0 : index
    %c0_4 = arith.constant 0 : index
    %3 = vector.load %arg3[%c0_3, %c0_4] : memref<64x8xf32, #tpu.memory_space<vmem>>, vector<64x8xf32>
    tpu.vector_store %arg3[%c0_3, %c0_4], %2 {strides = array<i32>} : memref<64x8xf32, #tpu.memory_space<vmem>>, vector<64x8xf32>,
    return
  }
  func.func @transform_0(%arg0: i32) -> (i32, i32) {
    %c0_i32 = arith.constant 0 : i32
    %c0_i32_0 = arith.constant 0 : i32
    return %arg0, %c0_i32 : i32, i32
  }
  func.func @transform_1(%arg0: i32) -> (i32, i32) {
    %c0_i32 = arith.constant 0 : i32
    %c0_i32_0 = arith.constant 0 : i32
    %c0_i32_1 = arith.constant 0 : i32
    return %c0_i32, %c0_i32_0 : i32, i32
  }
  func.func @transform_2(%arg0: i32) -> (i32, i32) {
    %c0_i32 = arith.constant 0 : i32
    %c0_i32_0 = arith.constant 0 : i32
    return %arg0, %c0_i32 : i32, i32
  }
}

module attributes {stable_mosaic.version = 11 : i64} {
  func.func @attn_kernel(%arg0: i32, %arg1: memref<64x1xf32, #tpu.memory_space<vmem>>, %arg2: memref<8x64xbf16, #tpu.memory_space<vmem>>, %arg3: memref<1x64x32xi8, #tpu.memory_space<vmem>>, %arg4: memref<1x1x32xf32, #tpu.memory_space<vmem>>, %arg5: memref<8x1xf32, #tpu.memory_space<vmem>>, %arg6: memref<1x8x32xf32, #tpu.memory_space<vmem>>) attributes {dimension_semantics = [#tpu.dimension_semantics<parallel>], iteration_bounds = array<i64: 2>, scalar_prefetch = 0 : i64, scratch_operands = 0 : i64, tpu.core_type = #tpu.core_type<tc>, window_params = [{pipeline_mode = #tpu.pipeline_mode<synchronous>, transform_indices = @transform_0, window_bounds = array<i64: 64, 1>}, {pipeline_mode = #tpu.pipeline_mode<synchronous>, transform_indices = @transform_1, window_bounds = array<i64: 8, 64>}, {transform_indices = @transform_2, window_bounds = array<i64: 1, 64, 32>}, {transform_indices = @transform_3, window_bounds = array<i64: 1, 1, 32>}, {pipeline_mode = #tpu.pipeline_mode<synchronous>, transform_indices = @transform_4, window_bounds = array<i64: 8, 1>}, {transform_indices = @transform_5, window_bounds = array<i64: 1, 8, 32>}]} {
    %c0 = arith.constant 0 : index
    %c0_0 = arith.constant 0 : index
    %c0_1 = arith.constant 0 : index
    %0 = vector.load %arg3[%c0, %c0_0, %c0_1] : memref<1x64x32xi8, #tpu.memory_space<vmem>>, vector<1x64x32xi8>
    %1 = vector.shape_cast %0 : vector<1x64x32xi8> to vector<64x32xi8>
    %c0_i8 = arith.constant 0 : i8
    %2 = vector.broadcast %c0_i8 : i8 to vector<64x32xi8>
    %3 = arith.cmpi ne, %1, %2 : vector<64x32xi8>
    %c0_2 = arith.constant 0 : index
    %c0_3 = arith.constant 0 : index
    %4 = vector.load %arg1[%c0_2, %c0_3] : memref<64x1xf32, #tpu.memory_space<vmem>>, vector<64x1xf32>
    %c0_4 = arith.constant 0 : index
    %c0_5 = arith.constant 0 : index
    %c0_6 = arith.constant 0 : index
    %5 = vector.load %arg4[%c0_4, %c0_5, %c0_6] : memref<1x1x32xf32, #tpu.memory_space<vmem>>, vector<1x1x32xf32>
    %6 = vector.shape_cast %5 : vector<1x1x32xf32> to vector<1x32xf32>
    %c0_7 = arith.constant 0 : index
    %c0_8 = arith.constant 0 : index
    %7 = vector.load %arg2[%c0_7, %c0_8] : memref<8x64xbf16, #tpu.memory_space<vmem>>, vector<8x64xbf16>
    %8 = vector.broadcast %4 : vector<64x1xf32> to vector<64x32xf32>
    %9 = vector.broadcast %6 : vector<1x32xf32> to vector<64x32xf32>
    %10 = arith.addf %8, %9 : vector<64x32xf32>
    %cst = arith.constant 2.000000e-01 : f32
    %11 = vector.broadcast %cst : f32 to vector<64x32xf32>
    %12 = arith.mulf %11, %10 : vector<64x32xf32>
    %13 = arith.maximumf %10, %12 : vector<64x32xf32>
    %cst_9 = arith.constant -1.000000e+30 : f32
    %14 = vector.broadcast %cst_9 : f32 to vector<64x32xf32>
    %15 = arith.select %3, %13, %14 : vector<64x32xi1>, vector<64x32xf32>
    %cst_10 = arith.constant dense<0xFF800000> : vector<32xf32>
    %16 = vector.multi_reduction <maximumf>, %15, %cst_10 [0] : vector<64x32xf32> to vector<32xf32>
    %17 = vector.shape_cast %16 : vector<32xf32> to vector<1x32xf32>
    %18 = vector.broadcast %17 : vector<1x32xf32> to vector<64x32xf32>
    %19 = arith.subf %15, %18 : vector<64x32xf32>
    %20 = math.exp %19 : vector<64x32xf32>
    %cst_11 = arith.constant dense<0.000000e+00> : vector<32xf32>
    %21 = vector.multi_reduction <add>, %20, %cst_11 [0] : vector<64x32xf32> to vector<32xf32>
    %22 = vector.shape_cast %21 : vector<32xf32> to vector<1x32xf32>
    %23 = arith.truncf %20 : vector<64x32xf32> to vector<64x32xbf16>
    %cst_12 = arith.constant dense<0.000000e+00> : vector<8x32xf32>
    %24 = tpu.matmul %7, %23, %cst_12 {dimension_numbers = #tpu.dot_dimension_numbers<[1], [0], [0], [1], [0, 0, 1, 1], [], []>} : vector<8x64xbf16>, vector<64x32xbf16>, vector<8x32xf32> -> vector<8x32xf32>
    %25 = tpu.reciprocal %22 {approx = true} : vector<1x32xf32> -> vector<1x32xf32>
    %26 = vector.broadcast %25 : vector<1x32xf32> to vector<8x32xf32>
    %27 = arith.mulf %24, %26 : vector<8x32xf32>
    %cst_13 = arith.constant 1.000000e+00 : f32
    %28 = vector.broadcast %cst_13 : f32 to vector<8x32xf32>
    %29 = arith.mulf %27, %28 : vector<8x32xf32>
    %c0_14 = arith.constant 0 : index
    %c0_15 = arith.constant 0 : index
    %30 = vector.load %arg5[%c0_14, %c0_15] : memref<8x1xf32, #tpu.memory_space<vmem>>, vector<8x1xf32>
    %31 = vector.broadcast %30 : vector<8x1xf32> to vector<8x32xf32>
    %32 = arith.addf %29, %31 : vector<8x32xf32>
    %c0_16 = arith.constant 0 : index
    %c0_17 = arith.constant 0 : index
    %c0_18 = arith.constant 0 : index
    %33 = vector.load %arg6[%c0_16, %c0_17, %c0_18] : memref<1x8x32xf32, #tpu.memory_space<vmem>>, vector<1x8x32xf32>
    %34 = vector.shape_cast %33 : vector<1x8x32xf32> to vector<8x32xf32>
    %35 = vector.shape_cast %32 : vector<8x32xf32> to vector<1x8x32xf32>
    tpu.vector_store %arg6[%c0_16, %c0_17, %c0_18], %35 {strides = array<i32>} : memref<1x8x32xf32, #tpu.memory_space<vmem>>, vector<1x8x32xf32>,
    return
  }
  func.func @transform_0(%arg0: i32) -> (i32, i32) {
    %c0_i32 = arith.constant 0 : i32
    %c0_i32_0 = arith.constant 0 : i32
    %c0_i32_1 = arith.constant 0 : i32
    return %c0_i32, %c0_i32_0 : i32, i32
  }
  func.func @transform_1(%arg0: i32) -> (i32, i32) {
    %c0_i32 = arith.constant 0 : i32
    %c0_i32_0 = arith.constant 0 : i32
    %c0_i32_1 = arith.constant 0 : i32
    return %c0_i32, %c0_i32_0 : i32, i32
  }
  func.func @transform_2(%arg0: i32) -> (i32, i32, i32) {
    %c0_i32 = arith.constant 0 : i32
    %c0_i32_0 = arith.constant 0 : i32
    %c0_i32_1 = arith.constant 0 : i32
    return %arg0, %c0_i32, %c0_i32_0 : i32, i32, i32
  }
  func.func @transform_3(%arg0: i32) -> (i32, i32, i32) {
    %c0_i32 = arith.constant 0 : i32
    %c0_i32_0 = arith.constant 0 : i32
    %c0_i32_1 = arith.constant 0 : i32
    return %arg0, %c0_i32, %c0_i32_0 : i32, i32, i32
  }
  func.func @transform_4(%arg0: i32) -> (i32, i32) {
    %c0_i32 = arith.constant 0 : i32
    %c0_i32_0 = arith.constant 0 : i32
    %c0_i32_1 = arith.constant 0 : i32
    return %c0_i32, %c0_i32_0 : i32, i32
  }
  func.func @transform_5(%arg0: i32) -> (i32, i32, i32) {
    %c0_i32 = arith.constant 0 : i32
    %c0_i32_0 = arith.constant 0 : i32
    %c0_i32_1 = arith.constant 0 : i32
    return %arg0, %c0_i32, %c0_i32_0 : i32, i32, i32
  }
}

</mosaic_0001>

<llo_original>
// kernel: _lambda_.4
$region0: #{_lambda_.4}
  #allocation0 [shape = 'u32[]', space=smem, size = 0x4, offset = 0x4, fixed_abs, tag = 'smem constant byte address 0x4 - core index']
  #allocation1 [shape = 'u32[144,128]{1,0:T(1,128)}', space=vmem, size = 0x12000, scoped, tag = 'internal scratch']
  %s0 = inlined_call_operand.vmem [shape: f32[64,16], index: 0, kind: input, shape index: {}]
  %s1 = inlined_call_operand.vmem [shape: f32[16,32], index: 1, kind: input, shape index: {}]
  %s2 = inlined_call_operand.vmem [shape: f32[64,32], index: 2, kind: output, shape index: {}]
  %s3 = sld [smem:[#allocation0]]
  $region18: #{_lambda_.4} parent=0
    _
  %s5 = ssub.s32 1, %s3
  %s6 = scalar_select 0, %s5, %s3
  // Predicated region
  $region2: #{_lambda_.4} parent=0 // pred_check
    _
  $region3: #{_lambda_.4} parent=0 // pred_check_branch
    %8 = sbr.rel (0) target = $region5
  $region4: #{_lambda_.4} parent=0 // pred_region
    _
  $region5: #{_lambda_.4} parent=0 // pred_fallthru
    _
  // Predicated region
  $region6: #{_lambda_.4} parent=0 // pred_check
    _
  $region7: #{_lambda_.4} parent=0 // pred_check_branch
    %10 = sbr.rel (0) target = $region9
  $region8: #{_lambda_.4} parent=0 // pred_region
    _
  $region9: #{_lambda_.4} parent=0 // pred_fallthru
    _
  %v11 = vld [vmem:[%s0] sm:$0xff]
  %v12 = vld [vmem:[%s0 + $0x8] sm:$0xff]
  %v13 = vld [vmem:[%s0 + $0x10] sm:$0xff]
  %v14 = vld [vmem:[%s0 + $0x18] sm:$0xff]
  %v15 = vld [vmem:[%s0 + $0x20] sm:$0xff]
  %v16 = vld [vmem:[%s0 + $0x28] sm:$0xff]
  %v17 = vld [vmem:[%s0 + $0x30] sm:$0xff]
  %v18 = vld [vmem:[%s0 + $0x38] sm:$0xff]
  %v19 = vld [vmem:[%s1] sm:$0xff]
  %v20 = vld [vmem:[%s1 + $0x8] sm:$0xff]
  %vm21 = vcmask 130048
  %v23 = vsel %vm21, %v11, 0
  %v26 = vsel %vm21, %v12, 0
  %v29 = vsel %vm21, %v13, 0
  %v32 = vsel %vm21, %v14, 0
  %v35 = vsel %vm21, %v15, 0
  %v38 = vsel %vm21, %v16, 0
  %v41 = vsel %vm21, %v17, 0
  %v44 = vsel %vm21, %v18, 0
  %46 = vmatprep.subr.mxu0 0.0
  %47 = vmatpush1.msra.mxu0 %v19
  %48 = vmatprep.subr.mxu0 0.0
  %49 = vmatpush1.msra.mxu0 %v20
  %50 = vmatprep.subr.mxu0 0.0
  %51 = vmatpush1.msra.mxu0 0.0
  %52 = vmatprep.subr.mxu0 0.0
  %53 = vmatpush1.msra.mxu0 0.0
  %54 = vmatprep.subr.mxu0 0.0
  %55 = vmatpush1.msra.mxu0 0.0
  %56 = vmatprep.subr.mxu0 0.0
  %57 = vmatpush1.msra.mxu0 0.0
  %58 = vmatprep.subr.mxu0 0.0
  %59 = vmatpush1.msra.mxu0 0.0
  %60 = vmatprep.subr.mxu0 0.0
  %61 = vmatpush1.msra.mxu0 0.0
  %62 = vmatprep.subr.mxu0 0.0
  %63 = vmatpush1.msra.mxu0 0.0
  %64 = vmatprep.subr.mxu0 0.0
  %65 = vmatpush1.msra.mxu0 0.0
  %66 = vmatprep.subr.mxu0 0.0
  %67 = vmatpush1.msra.mxu0 0.0
  %68 = vmatprep.subr.mxu0 0.0
  %69 = vmatpush1.msra.mxu0 0.0
  %70 = vmatprep.subr.mxu0 0.0
  %71 = vmatpush1.msra.mxu0 0.0
  %72 = vmatprep.subr.mxu0 0.0
  %73 = vmatpush1.msra.mxu0 0.0
  %74 = vmatprep.subr.mxu0 0.0
  %75 = vmatpush1.msra.mxu0 0.0
  %76 = vmatprep.subr.mxu0 0.0
  %77 = vmatpush1.msra.mxu0 0.0
  %78 = vmatprep.subr.mxu0 0.0
  %79 = vmatpush1.msra.mxu0 0.0
  %80 = vmatprep.subr.mxu0 0.0
  %81 = vmatpush1.msra.mxu0 0.0
  %82 = vmatprep.subr.mxu0 0.0
  %83 = vmatpush1.msra.mxu0 0.0
  %84 = vmatprep.subr.mxu0 0.0
  %85 = vmatpush1.msra.mxu0 0.0
  %86 = vmatprep.subr.mxu0 0.0
  %87 = vmatpush1.msra.mxu0 0.0
  %88 = vmatprep.subr.mxu0 0.0
  %89 = vmatpush1.msra.mxu0 0.0
  %90 = vmatprep.subr.mxu0 0.0
  %91 = vmatpush1.msra.mxu0 0.0
  %92 = vmatprep.subr.mxu0 0.0
  %93 = vmatpush1.msra.mxu0 0.0
  %94 = vmatprep.subr.mxu0 0.0
  %95 = vmatpush1.msra.mxu0 0.0
  %96 = vmatprep.subr.mxu0 0.0
  %97 = vmatpush1.msra.mxu0 0.0
  %98 = vmatprep.subr.mxu0 0.0
  %99 = vmatpush1.msra.mxu0 0.0
  %100 = vmatprep.subr.mxu0 0.0
  %101 = vmatpush1.msra.mxu0 0.0
  %102 = vmatprep.subr.mxu0 0.0
  %103 = vmatpush1.msra.mxu0 0.0
  %104 = vmatprep.subr.mxu0 0.0
  %105 = vmatpush1.msra.mxu0 0.0
  %106 = vmatprep.subr.mxu0 0.0
  %107 = vmatpush1.msra.mxu0 0.0
  %108 = vmatprep.subr.mxu0 0.0
  %109 = vmatpush1.msra.mxu0 0.0
  %110 = vmatprep.mubr.f32.mxu0 0.0
  %111 = vmatmul.mubr.f32.gmra.mrb[0].mxu0 %v23
  %v112 = vpop.f32.mrb[0].mxu0
  %v113 = vadd.f32 0.0, %v112
  %v114 = vpop.f32.mrb[0].mxu0
  %115 = vmatprep.mubr.f32.mxu0 0.0
  %116 = vmatmul.mubr.f32.gmra.mrb[0].mxu0 %v26
  %v117 = vpop.f32.mrb[0].mxu0
  %v118 = vadd.f32 0.0, %v117
  %v119 = vpop.f32.mrb[0].mxu0
  %120 = vmatprep.mubr.f32.mxu0 0.0
  %121 = vmatmul.mubr.f32.gmra.mrb[0].mxu0 %v29
  %v122 = vpop.f32.mrb[0].mxu0
  %v123 = vadd.f32 0.0, %v122
  %v124 = vpop.f32.mrb[0].mxu0
  %125 = vmatprep.mubr.f32.mxu0 0.0
  %126 = vmatmul.mubr.f32.gmra.mrb[0].mxu0 %v32
  %v127 = vpop.f32.mrb[0].mxu0
  %v128 = vadd.f32 0.0, %v127
  %v129 = vpop.f32.mrb[0].mxu0
  %130 = vmatprep.mubr.f32.mxu0 0.0
  %131 = vmatmul.mubr.f32.gmra.mrb[0].mxu0 %v35
  %v132 = vpop.f32.mrb[0].mxu0
  %v133 = vadd.f32 0.0, %v132
  %v134 = vpop.f32.mrb[0].mxu0
  %135 = vmatprep.mubr.f32.mxu0 0.0
  %136 = vmatmul.mubr.f32.gmra.mrb[0].mxu0 %v38
  %v137 = vpop.f32.mrb[0].mxu0
  %v138 = vadd.f32 0.0, %v137
  %v139 = vpop.f32.mrb[0].mxu0
  %140 = vmatprep.mubr.f32.mxu0 0.0
  %141 = vmatmul.mubr.f32.gmra.mrb[0].mxu0 %v41
  %v142 = vpop.f32.mrb[0].mxu0
  %v143 = vadd.f32 0.0, %v142
  %v144 = vpop.f32.mrb[0].mxu0
  %145 = vmatprep.mubr.f32.mxu0 0.0
  %146 = vmatmul.mubr.f32.gmra.mrb[0].mxu0 %v44
  %v147 = vpop.f32.mrb[0].mxu0
  %v148 = vadd.f32 0.0, %v147
  %v149 = vpop.f32.mrb[0].mxu0
  %150 = vdwg.mxu0
  %vm151 = vcmask 261120
  %152 = vst.msk [vmem:[%s2] sm:$0xff] %vm151, %v113
  %153 = vst.msk [vmem:[%s2 + $0x8] sm:$0xff] %vm151, %v118
  %154 = vst.msk [vmem:[%s2 + $0x10] sm:$0xff] %vm151, %v123
  %155 = vst.msk [vmem:[%s2 + $0x18] sm:$0xff] %vm151, %v128
  %156 = vst.msk [vmem:[%s2 + $0x20] sm:$0xff] %vm151, %v133
  %157 = vst.msk [vmem:[%s2 + $0x28] sm:$0xff] %vm151, %v138
  %158 = vst.msk [vmem:[%s2 + $0x30] sm:$0xff] %vm151, %v143
  %159 = vst.msk [vmem:[%s2 + $0x38] sm:$0xff] %vm151, %v148
  // Predicated region
  $region10: #{_lambda_.4} parent=0 // pred_check
    _
  $region11: #{_lambda_.4} parent=0 // pred_check_branch
    %161 = sbr.rel (0) target = $region13
  $region12: #{_lambda_.4} parent=0 // pred_region
    _
  $region13: #{_lambda_.4} parent=0 // pred_fallthru
    _
  // Predicated region
  $region14: #{_lambda_.4} parent=0 // pred_check
    _
  $region15: #{_lambda_.4} parent=0 // pred_check_branch
    %163 = sbr.rel (0) target = $region17
  $region16: #{_lambda_.4} parent=0 // pred_region
    _
  $region17: #{_lambda_.4} parent=0 // pred_fallthru
    _

// kernel: _lambda_.6
$region0: #{_lambda_.6}
  #allocation0 [shape = 'u32[]', space=smem, size = 0x4, offset = 0x4, fixed_abs, tag = 'smem constant byte address 0x4 - core index']
  #allocation1 [shape = 'u32[144,128]{1,0:T(1,128)}', space=vmem, size = 0x12000, scoped, tag = 'internal scratch']
  %s0 = inlined_call_operand.vmem [shape: f32[64,32], index: 0, kind: input, shape index: {}]
  %s1 = inlined_call_operand.vmem [shape: f32[32,8], index: 1, kind: input, shape index: {}]
  %s2 = inlined_call_operand.vmem [shape: f32[64,8], index: 2, kind: output, shape index: {}]
  %s3 = sld [smem:[#allocation0]]
  $region18: #{_lambda_.6} parent=0
    _
  %s5 = ssub.s32 1, %s3
  %s6 = scalar_select 0, %s5, %s3
  // Predicated region
  $region2: #{_lambda_.6} parent=0 // pred_check
    _
  $region3: #{_lambda_.6} parent=0 // pred_check_branch
    %8 = sbr.rel (0) target = $region5
  $region4: #{_lambda_.6} parent=0 // pred_region
    _
  $region5: #{_lambda_.6} parent=0 // pred_fallthru
    _
  // Predicated region
  $region6: #{_lambda_.6} parent=0 // pred_check
    _
  $region7: #{_lambda_.6} parent=0 // pred_check_branch
    %10 = sbr.rel (0) target = $region9
  $region8: #{_lambda_.6} parent=0 // pred_region
    _
  $region9: #{_lambda_.6} parent=0 // pred_fallthru
    _
  %v11 = vld [vmem:[%s0] sm:$0xff]
  %v12 = vld [vmem:[%s0 + $0x8] sm:$0xff]
  %v13 = vld [vmem:[%s0 + $0x10] sm:$0xff]
  %v14 = vld [vmem:[%s0 + $0x18] sm:$0xff]
  %v15 = vld [vmem:[%s0 + $0x20] sm:$0xff]
  %v16 = vld [vmem:[%s0 + $0x28] sm:$0xff]
  %v17 = vld [vmem:[%s0 + $0x30] sm:$0xff]
  %v18 = vld [vmem:[%s0 + $0x38] sm:$0xff]
  %v19 = vld [vmem:[%s1] sm:$0xff]
  %v20 = vld [vmem:[%s1 + $0x8] sm:$0xff]
  %v21 = vld [vmem:[%s1 + $0x10] sm:$0xff]
  %v22 = vld [vmem:[%s1 + $0x18] sm:$0xff]
  %vm23 = vcmask 261120
  %v25 = vsel %vm23, %v11, 0
  %v28 = vsel %vm23, %v12, 0
  %v31 = vsel %vm23, %v13, 0
  %v34 = vsel %vm23, %v14, 0
  %v37 = vsel %vm23, %v15, 0
  %v40 = vsel %vm23, %v16, 0
  %v43 = vsel %vm23, %v17, 0
  %v46 = vsel %vm23, %v18, 0
  %48 = vmatprep.subr.mxu0 0.0
  %49 = vmatpush1.msra.mxu0 %v19
  %50 = vmatprep.subr.mxu0 0.0
  %51 = vmatpush1.msra.mxu0 %v20
  %52 = vmatprep.subr.mxu0 0.0
  %53 = vmatpush1.msra.mxu0 %v21
  %54 = vmatprep.subr.mxu0 0.0
  %55 = vmatpush1.msra.mxu0 %v22
  %56 = vmatprep.subr.mxu0 0.0
  %57 = vmatpush1.msra.mxu0 0.0
  %58 = vmatprep.subr.mxu0 0.0
  %59 = vmatpush1.msra.mxu0 0.0
  %60 = vmatprep.subr.mxu0 0.0
  %61 = vmatpush1.msra.mxu0 0.0
  %62 = vmatprep.subr.mxu0 0.0
  %63 = vmatpush1.msra.mxu0 0.0
  %64 = vmatprep.subr.mxu0 0.0
  %65 = vmatpush1.msra.mxu0 0.0
  %66 = vmatprep.subr.mxu0 0.0
  %67 = vmatpush1.msra.mxu0 0.0
  %68 = vmatprep.subr.mxu0 0.0
  %69 = vmatpush1.msra.mxu0 0.0
  %70 = vmatprep.subr.mxu0 0.0
  %71 = vmatpush1.msra.mxu0 0.0
  %72 = vmatprep.subr.mxu0 0.0
  %73 = vmatpush1.msra.mxu0 0.0
  %74 = vmatprep.subr.mxu0 0.0
  %75 = vmatpush1.msra.mxu0 0.0
  %76 = vmatprep.subr.mxu0 0.0
  %77 = vmatpush1.msra.mxu0 0.0
  %78 = vmatprep.subr.mxu0 0.0
  %79 = vmatpush1.msra.mxu0 0.0
  %80 = vmatprep.subr.mxu0 0.0
  %81 = vmatpush1.msra.mxu0 0.0
  %82 = vmatprep.subr.mxu0 0.0
  %83 = vmatpush1.msra.mxu0 0.0
  %84 = vmatprep.subr.mxu0 0.0
  %85 = vmatpush1.msra.mxu0 0.0
  %86 = vmatprep.subr.mxu0 0.0
  %87 = vmatpush1.msra.mxu0 0.0
  %88 = vmatprep.subr.mxu0 0.0
  %89 = vmatpush1.msra.mxu0 0.0
  %90 = vmatprep.subr.mxu0 0.0
  %91 = vmatpush1.msra.mxu0 0.0
  %92 = vmatprep.subr.mxu0 0.0
  %93 = vmatpush1.msra.mxu0 0.0
  %94 = vmatprep.subr.mxu0 0.0
  %95 = vmatpush1.msra.mxu0 0.0
  %96 = vmatprep.subr.mxu0 0.0
  %97 = vmatpush1.msra.mxu0 0.0
  %98 = vmatprep.subr.mxu0 0.0
  %99 = vmatpush1.msra.mxu0 0.0
  %100 = vmatprep.subr.mxu0 0.0
  %101 = vmatpush1.msra.mxu0 0.0
  %102 = vmatprep.subr.mxu0 0.0
  %103 = vmatpush1.msra.mxu0 0.0
  %104 = vmatprep.subr.mxu0 0.0
  %105 = vmatpush1.msra.mxu0 0.0
  %106 = vmatprep.subr.mxu0 0.0
  %107 = vmatpush1.msra.mxu0 0.0
  %108 = vmatprep.subr.mxu0 0.0
  %109 = vmatpush1.msra.mxu0 0.0
  %110 = vmatprep.subr.mxu0 0.0
  %111 = vmatpush1.msra.mxu0 0.0
  %112 = vmatprep.mubr.f32.mxu0 0.0
  %113 = vmatmul.mubr.f32.gmra.mrb[0].mxu0 %v25
  %v114 = vpop.f32.mrb[0].mxu0
  %v115 = vadd.f32 0.0, %v114
  %v116 = vpop.f32.mrb[0].mxu0
  %117 = vmatprep.mubr.f32.mxu0 0.0
  %118 = vmatmul.mubr.f32.gmra.mrb[0].mxu0 %v28
  %v119 = vpop.f32.mrb[0].mxu0
  %v120 = vadd.f32 0.0, %v119
  %v121 = vpop.f32.mrb[0].mxu0
  %122 = vmatprep.mubr.f32.mxu0 0.0
  %123 = vmatmul.mubr.f32.gmra.mrb[0].mxu0 %v31
  %v124 = vpop.f32.mrb[0].mxu0
  %v125 = vadd.f32 0.0, %v124
  %v126 = vpop.f32.mrb[0].mxu0
  %127 = vmatprep.mubr.f32.mxu0 0.0
  %128 = vmatmul.mubr.f32.gmra.mrb[0].mxu0 %v34
  %v129 = vpop.f32.mrb[0].mxu0
  %v130 = vadd.f32 0.0, %v129
  %v131 = vpop.f32.mrb[0].mxu0
  %132 = vmatprep.mubr.f32.mxu0 0.0
  %133 = vmatmul.mubr.f32.gmra.mrb[0].mxu0 %v37
  %v134 = vpop.f32.mrb[0].mxu0
  %v135 = vadd.f32 0.0, %v134
  %v136 = vpop.f32.mrb[0].mxu0
  %137 = vmatprep.mubr.f32.mxu0 0.0
  %138 = vmatmul.mubr.f32.gmra.mrb[0].mxu0 %v40
  %v139 = vpop.f32.mrb[0].mxu0
  %v140 = vadd.f32 0.0, %v139
  %v141 = vpop.f32.mrb[0].mxu0
  %142 = vmatprep.mubr.f32.mxu0 0.0
  %143 = vmatmul.mubr.f32.gmra.mrb[0].mxu0 %v43
  %v144 = vpop.f32.mrb[0].mxu0
  %v145 = vadd.f32 0.0, %v144
  %v146 = vpop.f32.mrb[0].mxu0
  %147 = vmatprep.mubr.f32.mxu0 0.0
  %148 = vmatmul.mubr.f32.gmra.mrb[0].mxu0 %v46
  %v149 = vpop.f32.mrb[0].mxu0
  %v150 = vadd.f32 0.0, %v149
  %v151 = vpop.f32.mrb[0].mxu0
  %152 = vdwg.mxu0
  %vm153 = vcmask 64512
  %154 = vst.msk [vmem:[%s2] sm:$0xff] %vm153, %v115
  %155 = vst.msk [vmem:[%s2 + $0x8] sm:$0xff] %vm153, %v120
  %156 = vst.msk [vmem:[%s2 + $0x10] sm:$0xff] %vm153, %v125
  %157 = vst.msk [vmem:[%s2 + $0x18] sm:$0xff] %vm153, %v130
  %158 = vst.msk [vmem:[%s2 + $0x20] sm:$0xff] %vm153, %v135
  %159 = vst.msk [vmem:[%s2 + $0x28] sm:$0xff] %vm153, %v140
  %160 = vst.msk [vmem:[%s2 + $0x30] sm:$0xff] %vm153, %v145
  %161 = vst.msk [vmem:[%s2 + $0x38] sm:$0xff] %vm153, %v150
  // Predicated region
  $region10: #{_lambda_.6} parent=0 // pred_check
    _
  $region11: #{_lambda_.6} parent=0 // pred_check_branch
    %163 = sbr.rel (0) target = $region13
  $region12: #{_lambda_.6} parent=0 // pred_region
    _
  $region13: #{_lambda_.6} parent=0 // pred_fallthru
    _
  // Predicated region
  $region14: #{_lambda_.6} parent=0 // pred_check
    _
  $region15: #{_lambda_.6} parent=0 // pred_check_branch
    %165 = sbr.rel (0) target = $region17
  $region16: #{_lambda_.6} parent=0 // pred_region
    _
  $region17: #{_lambda_.6} parent=0 // pred_fallthru
    _

// kernel: _lambda_.5
$region0: #{_lambda_.5}
  #allocation0 [shape = 'u32[]', space=smem, size = 0x4, offset = 0x4, fixed_abs, tag = 'smem constant byte address 0x4 - core index']
  #allocation1 [shape = 'u32[144,128]{1,0:T(1,128)}', space=vmem, size = 0x12000, scoped, tag = 'internal scratch']
  %s0 = inlined_call_operand.vmem [shape: f32[64,4], index: 0, kind: input, shape index: {}]
  %s1 = inlined_call_operand.vmem [shape: bf16[32,64], index: 1, kind: input, shape index: {}]
  %s2 = inlined_call_operand.vmem [shape: s8[2,64,32], index: 2, kind: input, shape index: {}]
  %s3 = inlined_call_operand.vmem [shape: f32[2,4,32], index: 3, kind: input, shape index: {}]
  %s4 = inlined_call_operand.vmem [shape: f32[32,1], index: 4, kind: input, shape index: {}]
  %s5 = inlined_call_operand.vmem [shape: f32[2,32,32], index: 5, kind: output, shape index: {}]
  %s6 = sld [smem:[#allocation0]]
  $region53: #{_lambda_.5} parent=0
    _
  %s8 = ssub.s32 1, %s6
  %s9 = scalar_select 0, %s8, %s6
  loop: start=0, step=1, limit=4
  $region2: #{_lambda_.5} parent=0 // loop_pre_header
    _
  $region3: #{_lambda_.5} parent=0 // loop_header
    %s11 = sphi 0, %s15
    %p12 = scmp.ge.s32.totalorder %s11, 4
    %s19 = sphi 0, %s19
    %s21 = sphi 0, %s19
    %s22 = sphi 0, %s21
    %s36 = sphi 0, %s22
    %s40 = sphi 0, %s40
    %s42 = sphi 0, %s40
    %s43 = sphi 0, %s42
    %s57 = sphi 0, %s43
    %s63 = sphi 0, %s65
    %s66 = sphi 0, %s63
    %s67 = sphi 0, %s66
    %s83 = sphi 0, %s67
    %s89 = sphi 0, %s91
    %s92 = sphi 0, %s89
    %s93 = sphi 0, %s92
    %s109 = sphi 0, %s93
    %s113 = sphi 0, %s113
    %s115 = sphi 0, %s113
    %s116 = sphi 0, %s115
    %s130 = sphi 0, %s116
    %s136 = sphi 0, %s138
    %s139 = sphi 0, %s136
    %s140 = sphi 0, %s139
    %s156 = sphi 0, %s140
  $region4: #{_lambda_.5} parent=0 // loop_header_branch
    %14 = sbr.rel (%p12) target = $region8
  $region5: #{_lambda_.5} parent=0 // loop_body
    %s16 = ssub.s32 %s11, 1
    %s17 = ssub.s32 %s11, 2
    %s18 = sadd.s32 %s11, 1
    %s20 = sadd.s32 %s19, 1
    %p23 = scmp.eq.s32.totalorder %s11, 1
    %p24 = scmp.ne.s32.totalorder %s19, %s21
    %p25 = scmp.eq.s32.totalorder %s11, 0
    %p26 = por %p24, %p25
    %p27 = scmp.ne.s32.totalorder %s19, %s21
    %p28 = scmp.eq.s32.totalorder %s16, 1
    %p29 = por %p27, %p28
    %p30 = scmp.ne.s32.totalorder %s21, %s22
    %p31 = scmp.eq.s32.totalorder %s16, 0
    %p32 = por %p30, %p31
    %p33 = scmp.ne.s32.totalorder %s21, %s22
    %p34 = scmp.eq.s32.totalorder %s17, 1
    %p35 = por %p33, %p34
    %p37 = scmp.ne.s32.totalorder %s22, %s36
    %p38 = scmp.eq.s32.totalorder %s17, 0
    %p39 = por %p37, %p38
    %s41 = sadd.s32 %s40, 1
    %p44 = scmp.eq.s32.totalorder %s11, 1
    %p45 = scmp.ne.s32.totalorder %s40, %s42
    %p46 = scmp.eq.s32.totalorder %s11, 0
    %p47 = por %p45, %p46
    %p48 = scmp.ne.s32.totalorder %s40, %s42
    %p49 = scmp.eq.s32.totalorder %s16, 1
    %p50 = por %p48, %p49
    %p51 = scmp.ne.s32.totalorder %s42, %s43
    %p52 = scmp.eq.s32.totalorder %s16, 0
    %p53 = por %p51, %p52
    %p54 = scmp.ne.s32.totalorder %s42, %s43
    %p55 = scmp.eq.s32.totalorder %s17, 1
    %p56 = por %p54, %p55
    %p58 = scmp.ne.s32.totalorder %s43, %s57
    %p59 = scmp.eq.s32.totalorder %s17, 0
    %p60 = por %p58, %p59
    %s61 = ssub.s32 %s11, %s18
    %p62 = scmp.eq.s32.totalorder %s61, 0
    %s64 = sadd.s32 %s63, 1
    %s65 = scalar_select %p62, %s63, %s64
    %p68 = pneg %p62
    %p69 = scmp.eq.s32.totalorder %s11, 1
    %p70 = por %p68, %p69
    %p71 = scmp.ne.s32.totalorder %s63, %s66
    %p72 = scmp.eq.s32.totalorder %s11, 0
    %p73 = por %p71, %p72
    %p74 = scmp.ne.s32.totalorder %s63, %s66
    %p75 = scmp.eq.s32.totalorder %s16, 1
    %p76 = por %p74, %p75
    %p77 = scmp.ne.s32.totalorder %s66, %s67
    %p78 = scmp.eq.s32.totalorder %s16, 0
    %p79 = por %p77, %p78
    %p80 = scmp.ne.s32.totalorder %s66, %s67
    %p81 = scmp.eq.s32.totalorder %s17, 1
    %p82 = por %p80, %p81
    %p84 = scmp.ne.s32.totalorder %s67, %s83
    %p85 = scmp.eq.s32.totalorder %s17, 0
    %p86 = por %p84, %p85
    %s87 = ssub.s32 %s11, %s18
    %p88 = scmp.eq.s32.totalorder %s87, 0
    %s90 = sadd.s32 %s89, 1
    %s91 = scalar_select %p88, %s89, %s90
    %p94 = pneg %p88
    %p95 = scmp.eq.s32.totalorder %s11, 1
    %p96 = por %p94, %p95
    %p97 = scmp.ne.s32.totalorder %s89, %s92
    %p98 = scmp.eq.s32.totalorder %s11, 0
    %p99 = por %p97, %p98
    %p100 = scmp.ne.s32.totalorder %s89, %s92
    %p101 = scmp.eq.s32.totalorder %s16, 1
    %p102 = por %p100, %p101
    %p103 = scmp.ne.s32.totalorder %s92, %s93
    %p104 = scmp.eq.s32.totalorder %s16, 0
    %p105 = por %p103, %p104
    %p106 = scmp.ne.s32.totalorder %s92, %s93
    %p107 = scmp.eq.s32.totalorder %s17, 1
    %p108 = por %p106, %p107
    %p110 = scmp.ne.s32.totalorder %s93, %s109
    %p111 = scmp.eq.s32.totalorder %s17, 0
    %p112 = por %p110, %p111
    %s114 = sadd.s32 %s113, 1
    %p117 = scmp.eq.s32.totalorder %s11, 1
    %p118 = scmp.ne.s32.totalorder %s113, %s115
    %p119 = scmp.eq.s32.totalorder %s11, 0
    %p120 = por %p118, %p119
    %p121 = scmp.ne.s32.totalorder %s113, %s115
    %p122 = scmp.eq.s32.totalorder %s16, 1
    %p123 = por %p121, %p122
    %p124 = scmp.ne.s32.totalorder %s115, %s116
    %p125 = scmp.eq.s32.totalorder %s16, 0
    %p126 = por %p124, %p125
    %p127 = scmp.ne.s32.totalorder %s115, %s116
    %p128 = scmp.eq.s32.totalorder %s17, 1
    %p129 = por %p127, %p128
    %p131 = scmp.ne.s32.totalorder %s116, %s130
    %p132 = scmp.eq.s32.totalorder %s17, 0
    %p133 = por %p131, %p132
    %s134 = ssub.s32 %s11, %s18
    %p135 = scmp.eq.s32.totalorder %s134, 0
    %s137 = sadd.s32 %s136, 1
    %s138 = scalar_select %p135, %s136, %s137
    %p141 = pneg %p135
    %p142 = scmp.eq.s32.totalorder %s11, 1
    %p143 = por %p141, %p142
    %p144 = scmp.ne.s32.totalorder %s136, %s139
    %p145 = scmp.eq.s32.totalorder %s11, 0
    %p146 = por %p144, %p145
    %p147 = scmp.ne.s32.totalorder %s136, %s139
    %p148 = scmp.eq.s32.totalorder %s16, 1
    %p149 = por %p147, %p148
    %p150 = scmp.ne.s32.totalorder %s139, %s140
    %p151 = scmp.eq.s32.totalorder %s16, 0
    %p152 = por %p150, %p151
    %p153 = scmp.ne.s32.totalorder %s139, %s140
    %p154 = scmp.eq.s32.totalorder %s17, 1
    %p155 = por %p153, %p154
    %p157 = scmp.ne.s32.totalorder %s140, %s156
    %p158 = scmp.eq.s32.totalorder %s17, 0
    %p159 = por %p157, %p158
    %p160 = scmp.le.s32.totalorder 1, %s11
    %p161 = scmp.lt.s32.totalorder %s11, 3
    %p162 = pnand %p160, %p161
    %p163 = pneg %p162
    // Predicated region
    $region9: #{_lambda_.5} parent=5 // pred_check
      _
    $region10: #{_lambda_.5} parent=5 // pred_check_branch
      %165 = sbr.rel (%p162) target = $region12
    $region11: #{_lambda_.5} parent=5 // pred_region
      %s166 = ssub.s32 %s11, 1
      // Predicated region
      $region13: #{_lambda_.5} parent=11 // pred_check
        %p167 = pneg %p32
      $region14: #{_lambda_.5} parent=11 // pred_check_branch
        %169 = sbr.rel (%p167) target = $region16
      $region15: #{_lambda_.5} parent=11 // pred_region
        _
      $region16: #{_lambda_.5} parent=11 // pred_fallthru
        _
      // Predicated region
      $region17: #{_lambda_.5} parent=11 // pred_check
        %p170 = pneg %p53
      $region18: #{_lambda_.5} parent=11 // pred_check_branch
        %172 = sbr.rel (%p170) target = $region20
      $region19: #{_lambda_.5} parent=11 // pred_region
        _
      $region20: #{_lambda_.5} parent=11 // pred_fallthru
        _
      // Predicated region
      $region21: #{_lambda_.5} parent=11 // pred_check
        %p173 = pneg %p126
      $region22: #{_lambda_.5} parent=11 // pred_check_branch
        %175 = sbr.rel (%p173) target = $region24
      $region23: #{_lambda_.5} parent=11 // pred_region
        _
      $region24: #{_lambda_.5} parent=11 // pred_fallthru
        _
    $region12: #{_lambda_.5} parent=5 // pred_fallthru
      _
    %p176 = scmp.lt.s32.totalorder %s11, 2
    // Predicated region
    $region25: #{_lambda_.5} parent=5 // pred_check
      %p177 = pneg %p176
    $region26: #{_lambda_.5} parent=5 // pred_check_branch
      %179 = sbr.rel (%p177) target = $region28
    $region27: #{_lambda_.5} parent=5 // pred_region
      // Predicated region
      $region29: #{_lambda_.5} parent=27 // pred_check
        %p180 = pneg %p73
      $region30: #{_lambda_.5} parent=27 // pred_check_branch
        %182 = sbr.rel (%p180) target = $region32
      $region31: #{_lambda_.5} parent=27 // pred_region
        %p183 = scmp.lt.s32.totalorder %s11, 1
        %s184 = scalar_select %p183, %s11, 1
        %s185 = smul.addr %s184, 2
        %s186 = smul.addr %s185, 8
        %s187 = scalar_lea.vmem %s2, %s186
      $region32: #{_lambda_.5} parent=27 // pred_fallthru
        _
      // Predicated region
      $region33: #{_lambda_.5} parent=27 // pred_check
        %p188 = pneg %p99
      $region34: #{_lambda_.5} parent=27 // pred_check_branch
        %190 = sbr.rel (%p188) target = $region36
      $region35: #{_lambda_.5} parent=27 // pred_region
        %p191 = scmp.lt.s32.totalorder %s11, 1
        %s192 = scalar_select %p191, %s11, 1
        %s193 = smul.addr %s192, 4
        %s194 = scalar_lea.vmem %s3, %s193
      $region36: #{_lambda_.5} parent=27 // pred_fallthru
        _
    $region28: #{_lambda_.5} parent=5 // pred_fallthru
      _
    %p195 = scmp.le.s32.totalorder 1, %s11
    %p196 = scmp.lt.s32.totalorder %s11, 3
    %p197 = pnand %p195, %p196
    %p198 = pneg %p197
    // Predicated region
    $region37: #{_lambda_.5} parent=5 // pred_check
      _
    $region38: #{_lambda_.5} parent=5 // pred_check_branch
      %200 = sbr.rel (%p197) target = $region40
    $region39: #{_lambda_.5} parent=5 // pred_region
      %s201 = ssub.s32 %s11, 1
      %p202 = pneg %p32
      %p203 = pneg %p29
      %p204 = pneg %p53
      %p205 = pneg %p50
      %p206 = scmp.lt.s32.totalorder %s16, 1
      %s207 = scalar_select %p206, %s16, 1
      %s208 = smul.addr %s207, 2
      %s209 = smul.addr %s208, 8
      %s210 = scalar_lea.vmem %s2, %s209
      %p211 = pneg %p79
      %p212 = pneg %p76
      %p213 = scmp.lt.s32.totalorder %s16, 1
      %s214 = scalar_select %p213, %s16, 1
      %s215 = smul.addr %s214, 4
      %s216 = scalar_lea.vmem %s3, %s215
      %p217 = pneg %p105
      %p218 = pneg %p102
      %p219 = pneg %p126
      %p220 = pneg %p123
      %p221 = pneg %p152
      %p222 = pneg %p149
      %p223 = scmp.lt.s32.totalorder %s16, 1
      %s224 = scalar_select %p223, %s16, 1
      %s225 = smul.addr %s224, 4
      %s226 = smul.addr %s225, 8
      %s227 = scalar_lea.vmem %s5, %s226
      %p228 = scmp.lt.s32.totalorder %s16, 1
      %s229 = scalar_select %p228, %s16, 1
      %s230 = smul.addr %s229, 2
      %s231 = smul.addr %s230, 8
      %s232 = scalar_lea.vmem %s2, %s231
      %p233 = scmp.lt.s32.totalorder %s16, 1
      %s234 = scalar_select %p233, %s16, 1
      %s235 = smul.addr %s234, 4
      %s236 = scalar_lea.vmem %s3, %s235
      %p237 = scmp.lt.s32.totalorder %s16, 1
      %s238 = scalar_select %p237, %s16, 1
      %s239 = smul.addr %s238, 4
      %s240 = smul.addr %s239, 8
      %s241 = scalar_lea.vmem %s5, %s240
      %v245 = vld [vmem:[%s232] sm:$0xff]
      %v246 = vld [vmem:[%s232 + $0x8] sm:$0xff]
      %vm247 = vnez %v245
      %vm248 = vnez %v246
      %v249 = vld [vmem:[%s0] sm:$0xff]
      %v250 = vld [vmem:[%s0 + $0x8] sm:$0xff]
      %v251 = vld [vmem:[%s0 + $0x10] sm:$0xff]
      %v252 = vld [vmem:[%s0 + $0x18] sm:$0xff]
      %v253 = vld [vmem:[%s0 + $0x20] sm:$0xff]
      %v254 = vld [vmem:[%s0 + $0x28] sm:$0xff]
      %v255 = vld [vmem:[%s0 + $0x30] sm:$0xff]
      %v256 = vld [vmem:[%s0 + $0x38] sm:$0xff]
      %v257 = vld [vmem:[%s236] sm:$0xf]
      %v258 = vld [vmem:[%s1] sm:$0xf]
      %v259 = vld [vmem:[%s1 + $0x4] sm:$0xf]
      %v260 = vld [vmem:[%s1 + $0x8] sm:$0xf]
      %v261 = vld [vmem:[%s1 + $0xc] sm:$0xf]
      %263 = vset.pattern.permute.xlu0 0
      %264 = vperm.xlu0 %263, %v249
      %v265 = vpop.permute.xlu0 %264
      %268 = vset.pattern.permute.xlu0 0
      %269 = vperm.xlu0 %268, %v250
      %v270 = vpop.permute.xlu0 %269
      %273 = vset.pattern.permute.xlu0 0
      %274 = vperm.xlu0 %273, %v251
      %v275 = vpop.permute.xlu0 %274
      %278 = vset.pattern.permute.xlu0 0
      %279 = vperm.xlu0 %278, %v252
      %v280 = vpop.permute.xlu0 %279
      %283 = vset.pattern.permute.xlu0 0
      %284 = vperm.xlu0 %283, %v253
      %v285 = vpop.permute.xlu0 %284
      %288 = vset.pattern.permute.xlu0 0
      %289 = vperm.xlu0 %288, %v254
      %v290 = vpop.permute.xlu0 %289
      %293 = vset.pattern.permute.xlu0 0
      %294 = vperm.xlu0 %293, %v255
      %v295 = vpop.permute.xlu0 %294
      %298 = vset.pattern.permute.xlu0 0
      %299 = vperm.xlu0 %298, %v256
      %v300 = vpop.permute.xlu0 %299
      %v302 = vlaneseq
      %v303 = vshrl.u32 %v302, 7
      %v304 = vsub.s32 0, %v303
      %v305 = vrot.slane %v257, %v304
      %v306 = vadd.f32 %v265, %v305
      %v307 = vadd.f32 %v270, %v305
      %v308 = vadd.f32 %v275, %v305
      %v309 = vadd.f32 %v280, %v305
      %v310 = vadd.f32 %v285, %v305
      %v311 = vadd.f32 %v290, %v305
      %v312 = vadd.f32 %v295, %v305
      %v313 = vadd.f32 %v300, %v305
      %v314 = vmul.f32 %v306, 0.2
      %v315 = vmul.f32 %v307, 0.2
      %v316 = vmul.f32 %v308, 0.2
      %v317 = vmul.f32 %v309, 0.2
      %v318 = vmul.f32 %v310, 0.2
      %v319 = vmul.f32 %v311, 0.2
      %v320 = vmul.f32 %v312, 0.2
      %v321 = vmul.f32 %v313, 0.2
      %v322 = vmax.f32 %v306, %v314
      %v323 = vmax.f32 %v307, %v315
      %v324 = vmax.f32 %v308, %v316
      %v325 = vmax.f32 %v309, %v317
      %v326 = vmax.f32 %v310, %v318
      %v327 = vmax.f32 %v311, %v319
      %v328 = vmax.f32 %v312, %v320
      %v329 = vmax.f32 %v313, %v321
      %v330 = vsel %vm247, 16843009, 0
      %v331 = vsel %vm248, 16843009, 0
      %v332 = vunpack.c.0.s8 %v330
      %v333 = vunpack.c.1.s8 %v330
      %v334 = vunpack.c.2.s8 %v330
      %v335 = vunpack.c.3.s8 %v330
      %v336 = vunpack.c.0.s8 %v331
      %v337 = vunpack.c.1.s8 %v331
      %v338 = vunpack.c.2.s8 %v331
      %v339 = vunpack.c.3.s8 %v331
      %v340 = vpack.c.b16 %v332, %v332
      %v341 = vpack.c.b8 %v340, %v340
      %v342 = vpack.c.b16 %v333, %v333
      %v343 = vpack.c.b8 %v342, %v342
      %v344 = vpack.c.b16 %v334, %v334
      %v345 = vpack.c.b8 %v344, %v344
      %v346 = vpack.c.b16 %v335, %v335
      %v347 = vpack.c.b8 %v346, %v346
      %v348 = vpack.c.b16 %v336, %v336
      %v349 = vpack.c.b8 %v348, %v348
      %v350 = vpack.c.b16 %v337, %v337
      %v351 = vpack.c.b8 %v350, %v350
      %v352 = vpack.c.b16 %v338, %v338
      %v353 = vpack.c.b8 %v352, %v352
      %v354 = vpack.c.b16 %v339, %v339
      %v355 = vpack.c.b8 %v354, %v354
      %vm356 = vnez %v341
      %vm357 = vnez %v343
      %vm358 = vnez %v345
      %vm359 = vnez %v347
      %vm360 = vnez %v349
      %vm361 = vnez %v351
      %vm362 = vnez %v353
      %vm363 = vnez %v355
      %v364 = vsel %vm356, 16843009, 0
      %v365 = vsel %vm357, 16843009, 0
      %v366 = vsel %vm358, 16843009, 0
      %v367 = vsel %vm359, 16843009, 0
      %v368 = vsel %vm360, 16843009, 0
      %v369 = vsel %vm361, 16843009, 0
      %v370 = vsel %vm362, 16843009, 0
      %v371 = vsel %vm363, 16843009, 0
      %v372 = vunpack.c.0.s8 %v364
      %v373 = vunpack.c.0.s8 %v365
      %v374 = vunpack.c.0.s8 %v366
      %v375 = vunpack.c.0.s8 %v367
      %v376 = vunpack.c.0.s8 %v368
      %v377 = vunpack.c.0.s8 %v369
      %v378 = vunpack.c.0.s8 %v370
      %v379 = vunpack.c.0.s8 %v371
      %vm380 = vcmp.ne.s32.totalorder %v372, 0
      %vm381 = vcmp.ne.s32.totalorder %v373, 0
      %vm382 = vcmp.ne.s32.totalorder %v374, 0
      %vm383 = vcmp.ne.s32.totalorder %v375, 0
      %vm384 = vcmp.ne.s32.totalorder %v376, 0
      %vm385 = vcmp.ne.s32.totalorder %v377, 0
      %vm386 = vcmp.ne.s32.totalorder %v378, 0
      %vm387 = vcmp.ne.s32.totalorder %v379, 0
      %v388 = vsel %vm380, %v322, -1e+30
      %v389 = vsel %vm381, %v323, -1e+30
      %v390 = vsel %vm382, %v324, -1e+30
      %v391 = vsel %vm383, %v325, -1e+30
      %v392 = vsel %vm384, %v326, -1e+30
      %v393 = vsel %vm385, %v327, -1e+30
      %v394 = vsel %vm386, %v328, -1e+30
      %v395 = vsel %vm387, %v329, -1e+30
      %vm396 = vcmask 261120
      %v397 = vsel %vm396, %v388, -inf
      %v398 = vsel %vm396, %v389, -inf
      %v399 = vsel %vm396, %v390, -inf
      %v400 = vsel %vm396, %v391, -inf
      %v401 = vsel %vm396, %v392, -inf
      %v402 = vmax.f32 %v397, %v401
      %v403 = vsel %vm396, %v393, -inf
      %v404 = vmax.f32 %v398, %v403
      %v405 = vsel %vm396, %v394, -inf
      %v406 = vmax.f32 %v399, %v405
      %v407 = vsel %vm396, %v395, -inf
      %v408 = vmax.f32 %v400, %v407
      %v409 = vmax.f32 %v402, %v404
      %v410 = vmax.f32 %v406, %v408
      %v411 = vmax.f32 %v409, %v410
      %v412 = vrot.slane %v411, 4
      %v413 = vmax.f32 %v411, %v412
      %v414 = vrot.slane %v413, 2
      %v415 = vmax.f32 %v413, %v414
      %v416 = vrot.slane %v415, 1
      %v417 = vmax.f32 %v415, %v416
      %v418 = vsub.f32 %v388, %v417
      %v419 = vsub.f32 %v389, %v417
      %v420 = vsub.f32 %v390, %v417
      %v421 = vsub.f32 %v391, %v417
      %v422 = vsub.f32 %v392, %v417
      %v423 = vsub.f32 %v393, %v417
      %v424 = vsub.f32 %v394, %v417
      %v425 = vsub.f32 %v395, %v417
      %v426 = vmul.f32 %v418, 1.442695
      %v427 = vpow.pop %v426
      %v428 = vmul.f32 %v419, 1.442695
      %v429 = vpow.pop %v428
      %v430 = vmul.f32 %v420, 1.442695
      %v431 = vpow.pop %v430
      %v432 = vmul.f32 %v421, 1.442695
      %v433 = vpow.pop %v432
      %v434 = vmul.f32 %v422, 1.442695
      %v435 = vpow.pop %v434
      %v436 = vmul.f32 %v423, 1.442695
      %v437 = vpow.pop %v436
      %v438 = vmul.f32 %v424, 1.442695
      %v439 = vpow.pop %v438
      %v440 = vmul.f32 %v425, 1.442695
      %v441 = vpow.pop %v440
      %v442 = vsel %vm396, %v427, 0.0
      %v443 = vsel %vm396, %v429, 0.0
      %v444 = vadd.f32 %v442, %v443
      %v445 = vsel %vm396, %v431, 0.0
      %v446 = vadd.f32 %v444, %v445
      %v447 = vsel %vm396, %v433, 0.0
      %v448 = vadd.f32 %v446, %v447
      %v449 = vsel %vm396, %v435, 0.0
      %v450 = vadd.f32 %v448, %v449
      %v451 = vsel %vm396, %v437, 0.0
      %v452 = vadd.f32 %v450, %v451
      %v453 = vsel %vm396, %v439, 0.0
      %v454 = vadd.f32 %v452, %v453
      %v455 = vsel %vm396, %v441, 0.0
      %v456 = vadd.f32 %v454, %v455
      %v457 = vrot.slane %v456, 4
      %v458 = vadd.f32 %v456, %v457
      %v459 = vrot.slane %v458, 2
      %v460 = vadd.f32 %v458, %v459
      %v461 = vrot.slane %v460, 1
      %v462 = vadd.f32 %v460, %v461
      %v463 = vpack.c.bf16 %v429, %v427
      %v464 = vpack.c.bf16 %v433, %v431
      %v465 = vpack.c.bf16 %v437, %v435
      %v466 = vpack.c.bf16 %v441, %v439
      %vm467 = vcmask 523264
      %v469 = vsel %vm467, %v258, 0
      %471 = vmatprep.subr.bf16.mxu0 0
      %472 = vmatpush1.bf16.msra.mxu0 %v463
      %473 = vmatprep.subr.bf16.mxu0 0
      %474 = vmatpush1.bf16.msra.mxu0 %v464
      %475 = vmatprep.subr.bf16.mxu0 0
      %476 = vmatpush1.bf16.msra.mxu0 %v465
      %477 = vmatprep.subr.bf16.mxu0 0
      %478 = vmatpush1.bf16.msra.mxu0 %v466
      %479 = vmatprep.subr.bf16.mxu0 0
      %480 = vmatpush1.bf16.msra.mxu0 0
      %481 = vmatprep.subr.bf16.mxu0 0
      %482 = vmatpush1.bf16.msra.mxu0 0
      %483 = vmatprep.subr.bf16.mxu0 0
      %484 = vmatpush1.bf16.msra.mxu0 0
      %485 = vmatprep.subr.bf16.mxu0 0
      %486 = vmatpush1.bf16.msra.mxu0 0
      %487 = vmatprep.subr.bf16.mxu0 0
      %488 = vmatpush1.bf16.msra.mxu0 0
      %489 = vmatprep.subr.bf16.mxu0 0
      %490 = vmatpush1.bf16.msra.mxu0 0
      %491 = vmatprep.subr.bf16.mxu0 0
      %492 = vmatpush1.bf16.msra.mxu0 0
      %493 = vmatprep.subr.bf16.mxu0 0
      %494 = vmatpush1.bf16.msra.mxu0 0
      %495 = vmatprep.subr.bf16.mxu0 0
      %496 = vmatpush1.bf16.msra.mxu0 0
      %497 = vmatprep.subr.bf16.mxu0 0
      %498 = vmatpush1.bf16.msra.mxu0 0
      %499 = vmatprep.subr.bf16.mxu0 0
      %500 = vmatpush1.bf16.msra.mxu0 0
      %501 = vmatprep.subr.bf16.mxu0 0
      %502 = vmatpush1.bf16.msra.mxu0 0
      %503 = vmatprep.mubr.bf16.mxu0 0
      %504 = vmatmul.mubr.bf16.gmra.mrb[0].mxu0 %v469
      %v505 = vpop.f32.mrb[0].mxu0
      %v506 = vadd.f32 0.0, %v505
      %v507 = vpop.f32.mrb[0].mxu0
      %v508 = vpop.f32.mrb[0].mxu0
      %v509 = vpop.f32.mrb[0].mxu0
      %510 = vdwg.mxu0
      %v511 = vrcp.pop %v462
      %v512 = vmul.f32 %v506, %v511
      %513 = vset.pattern.permute.xlu0 1
      %514 = vperm.xlu0 %513, %v249
      %v515 = vpop.permute.xlu0 %514
      %517 = vset.pattern.permute.xlu0 1
      %518 = vperm.xlu0 %517, %v250
      %v519 = vpop.permute.xlu0 %518
      %521 = vset.pattern.permute.xlu0 1
      %522 = vperm.xlu0 %521, %v251
      %v523 = vpop.permute.xlu0 %522
      %525 = vset.pattern.permute.xlu0 1
      %526 = vperm.xlu0 %525, %v252
      %v527 = vpop.permute.xlu0 %526
      %529 = vset.pattern.permute.xlu0 1
      %530 = vperm.xlu0 %529, %v253
      %v531 = vpop.permute.xlu0 %530
      %533 = vset.pattern.permute.xlu0 1
      %534 = vperm.xlu0 %533, %v254
      %v535 = vpop.permute.xlu0 %534
      %537 = vset.pattern.permute.xlu0 1
      %538 = vperm.xlu0 %537, %v255
      %v539 = vpop.permute.xlu0 %538
      %541 = vset.pattern.permute.xlu0 1
      %542 = vperm.xlu0 %541, %v256
      %v543 = vpop.permute.xlu0 %542
      %v545 = vlaneseq
      %v546 = vshrl.u32 %v545, 7
      %v547 = vsub.s32 1, %v546
      %v548 = vrot.slane %v257, %v547
      %v549 = vadd.f32 %v515, %v548
      %v550 = vadd.f32 %v519, %v548
      %v551 = vadd.f32 %v523, %v548
      %v552 = vadd.f32 %v527, %v548
      %v553 = vadd.f32 %v531, %v548
      %v554 = vadd.f32 %v535, %v548
      %v555 = vadd.f32 %v539, %v548
      %v556 = vadd.f32 %v543, %v548
      %v557 = vmul.f32 %v549, 0.2
      %v558 = vmul.f32 %v550, 0.2
      %v559 = vmul.f32 %v551, 0.2
      %v560 = vmul.f32 %v552, 0.2
      %v561 = vmul.f32 %v553, 0.2
      %v562 = vmul.f32 %v554, 0.2
      %v563 = vmul.f32 %v555, 0.2
      %v564 = vmul.f32 %v556, 0.2
      %v565 = vmax.f32 %v549, %v557
      %v566 = vmax.f32 %v550, %v558
      %v567 = vmax.f32 %v551, %v559
      %v568 = vmax.f32 %v552, %v560
      %v569 = vmax.f32 %v553, %v561
      %v570 = vmax.f32 %v554, %v562
      %v571 = vmax.f32 %v555, %v563
      %v572 = vmax.f32 %v556, %v564
      %v573 = vsel %vm380, %v565, -1e+30
      %v574 = vsel %vm381, %v566, -1e+30
      %v575 = vsel %vm382, %v567, -1e+30
      %v576 = vsel %vm383, %v568, -1e+30
      %v577 = vsel %vm384, %v569, -1e+30
      %v578 = vsel %vm385, %v570, -1e+30
      %v579 = vsel %vm386, %v571, -1e+30
      %v580 = vsel %vm387, %v572, -1e+30
      %v581 = vsel %vm396, %v573, -inf
      %v582 = vsel %vm396, %v574, -inf
      %v583 = vsel %vm396, %v575, -inf
      %v584 = vsel %vm396, %v576, -inf
      %v585 = vsel %vm396, %v577, -inf
      %v586 = vmax.f32 %v581, %v585
      %v587 = vsel %vm396, %v578, -inf
      %v588 = vmax.f32 %v582, %v587
      %v589 = vsel %vm396, %v579, -inf
      %v590 = vmax.f32 %v583, %v589
      %v591 = vsel %vm396, %v580, -inf
      %v592 = vmax.f32 %v584, %v591
      %v593 = vmax.f32 %v586, %v588
      %v594 = vmax.f32 %v590, %v592
      %v595 = vmax.f32 %v593, %v594
      %v596 = vrot.slane %v595, 4
      %v597 = vmax.f32 %v595, %v596
      %v598 = vrot.slane %v597, 2
      %v599 = vmax.f32 %v597, %v598
      %v600 = vrot.slane %v599, 1
      %v601 = vmax.f32 %v599, %v600
      %v602 = vsub.f32 %v573, %v601
      %v603 = vsub.f32 %v574, %v601
      %v604 = vsub.f32 %v575, %v601
      %v605 = vsub.f32 %v576, %v601
      %v606 = vsub.f32 %v577, %v601
      %v607 = vsub.f32 %v578, %v601
      %v608 = vsub.f32 %v579, %v601
      %v609 = vsub.f32 %v580, %v601
      %v610 = vmul.f32 %v602, 1.442695
      %v611 = vpow.pop %v610
      %v612 = vmul.f32 %v603, 1.442695
      %v613 = vpow.pop %v612
      %v614 = vmul.f32 %v604, 1.442695
      %v615 = vpow.pop %v614
      %v616 = vmul.f32 %v605, 1.442695
      %v617 = vpow.pop %v616
      %v618 = vmul.f32 %v606, 1.442695
      %v619 = vpow.pop %v618
      %v620 = vmul.f32 %v607, 1.442695
      %v621 = vpow.pop %v620
      %v622 = vmul.f32 %v608, 1.442695
      %v623 = vpow.pop %v622
      %v624 = vmul.f32 %v609, 1.442695
      %v625 = vpow.pop %v624
      %v626 = vsel %vm396, %v611, 0.0
      %v627 = vsel %vm396, %v613, 0.0
      %v628 = vadd.f32 %v626, %v627
      %v629 = vsel %vm396, %v615, 0.0
      %v630 = vadd.f32 %v628, %v629
      %v631 = vsel %vm396, %v617, 0.0
      %v632 = vadd.f32 %v630, %v631
      %v633 = vsel %vm396, %v619, 0.0
      %v634 = vadd.f32 %v632, %v633
      %v635 = vsel %vm396, %v621, 0.0
      %v636 = vadd.f32 %v634, %v635
      %v637 = vsel %vm396, %v623, 0.0
      %v638 = vadd.f32 %v636, %v637
      %v639 = vsel %vm396, %v625, 0.0
      %v640 = vadd.f32 %v638, %v639
      %v641 = vrot.slane %v640, 4
      %v642 = vadd.f32 %v640, %v641
      %v643 = vrot.slane %v642, 2
      %v644 = vadd.f32 %v642, %v643
      %v645 = vrot.slane %v644, 1
      %v646 = vadd.f32 %v644, %v645
      %v647 = vpack.c.bf16 %v613, %v611
      %v648 = vpack.c.bf16 %v617, %v615
      %v649 = vpack.c.bf16 %v621, %v619
      %v650 = vpack.c.bf16 %v625, %v623
      %v652 = vsel %vm467, %v259, 0
      %654 = vmatprep.subr.bf16.mxu0 0
      %655 = vmatpush1.bf16.msra.mxu0 %v647
      %656 = vmatprep.subr.bf16.mxu0 0
      %657 = vmatpush1.bf16.msra.mxu0 %v648
      %658 = vmatprep.subr.bf16.mxu0 0
      %659 = vmatpush1.bf16.msra.mxu0 %v649
      %660 = vmatprep.subr.bf16.mxu0 0
      %661 = vmatpush1.bf16.msra.mxu0 %v650
      %662 = vmatprep.subr.bf16.mxu0 0
      %663 = vmatpush1.bf16.msra.mxu0 0
      %664 = vmatprep.subr.bf16.mxu0 0
      %665 = vmatpush1.bf16.msra.mxu0 0
      %666 = vmatprep.subr.bf16.mxu0 0
      %667 = vmatpush1.bf16.msra.mxu0 0
      %668 = vmatprep.subr.bf16.mxu0 0
      %669 = vmatpush1.bf16.msra.mxu0 0
      %670 = vmatprep.subr.bf16.mxu0 0
      %671 = vmatpush1.bf16.msra.mxu0 0
      %672 = vmatprep.subr.bf16.mxu0 0
      %673 = vmatpush1.bf16.msra.mxu0 0
      %674 = vmatprep.subr.bf16.mxu0 0
      %675 = vmatpush1.bf16.msra.mxu0 0
      %676 = vmatprep.subr.bf16.mxu0 0
      %677 = vmatpush1.bf16.msra.mxu0 0
      %678 = vmatprep.subr.bf16.mxu0 0
      %679 = vmatpush1.bf16.msra.mxu0 0
      %680 = vmatprep.subr.bf16.mxu0 0
      %681 = vmatpush1.bf16.msra.mxu0 0
      %682 = vmatprep.subr.bf16.mxu0 0
      %683 = vmatpush1.bf16.msra.mxu0 0
      %684 = vmatprep.subr.bf16.mxu0 0
      %685 = vmatpush1.bf16.msra.mxu0 0
      %686 = vmatprep.mubr.bf16.mxu0 0
      %687 = vmatmul.mubr.bf16.gmra.mrb[0].mxu0 %v652
      %v688 = vpop.f32.mrb[0].mxu0
      %v689 = vadd.f32 0.0, %v688
      %v690 = vpop.f32.mrb[0].mxu0
      %v691 = vpop.f32.mrb[0].mxu0
      %v692 = vpop.f32.mrb[0].mxu0
      %693 = vdwg.mxu0
      %v694 = vrcp.pop %v646
      %v695 = vmul.f32 %v689, %v694
      %696 = vset.pattern.permute.xlu0 2
      %697 = vperm.xlu0 %696, %v249
      %v698 = vpop.permute.xlu0 %697
      %700 = vset.pattern.permute.xlu0 2
      %701 = vperm.xlu0 %700, %v250
      %v702 = vpop.permute.xlu0 %701
      %704 = vset.pattern.permute.xlu0 2
      %705 = vperm.xlu0 %704, %v251
      %v706 = vpop.permute.xlu0 %705
      %708 = vset.pattern.permute.xlu0 2
      %709 = vperm.xlu0 %708, %v252
      %v710 = vpop.permute.xlu0 %709
      %712 = vset.pattern.permute.xlu0 2
      %713 = vperm.xlu0 %712, %v253
      %v714 = vpop.permute.xlu0 %713
      %716 = vset.pattern.permute.xlu0 2
      %717 = vperm.xlu0 %716, %v254
      %v718 = vpop.permute.xlu0 %717
      %720 = vset.pattern.permute.xlu0 2
      %721 = vperm.xlu0 %720, %v255
      %v722 = vpop.permute.xlu0 %721
      %724 = vset.pattern.permute.xlu0 2
      %725 = vperm.xlu0 %724, %v256
      %v726 = vpop.permute.xlu0 %725
      %v728 = vlaneseq
      %v729 = vshrl.u32 %v728, 7
      %v730 = vsub.s32 2, %v729
      %v731 = vrot.slane %v257, %v730
      %v732 = vadd.f32 %v698, %v731
      %v733 = vadd.f32 %v702, %v731
      %v734 = vadd.f32 %v706, %v731
      %v735 = vadd.f32 %v710, %v731
      %v736 = vadd.f32 %v714, %v731
      %v737 = vadd.f32 %v718, %v731
      %v738 = vadd.f32 %v722, %v731
      %v739 = vadd.f32 %v726, %v731
      %v740 = vmul.f32 %v732, 0.2
      %v741 = vmul.f32 %v733, 0.2
      %v742 = vmul.f32 %v734, 0.2
      %v743 = vmul.f32 %v735, 0.2
      %v744 = vmul.f32 %v736, 0.2
      %v745 = vmul.f32 %v737, 0.2
      %v746 = vmul.f32 %v738, 0.2
      %v747 = vmul.f32 %v739, 0.2
      %v748 = vmax.f32 %v732, %v740
      %v749 = vmax.f32 %v733, %v741
      %v750 = vmax.f32 %v734, %v742
      %v751 = vmax.f32 %v735, %v743
      %v752 = vmax.f32 %v736, %v744
      %v753 = vmax.f32 %v737, %v745
      %v754 = vmax.f32 %v738, %v746
      %v755 = vmax.f32 %v739, %v747
      %v756 = vsel %vm380, %v748, -1e+30
      %v757 = vsel %vm381, %v749, -1e+30
      %v758 = vsel %vm382, %v750, -1e+30
      %v759 = vsel %vm383, %v751, -1e+30
      %v760 = vsel %vm384, %v752, -1e+30
      %v761 = vsel %vm385, %v753, -1e+30
      %v762 = vsel %vm386, %v754, -1e+30
      %v763 = vsel %vm387, %v755, -1e+30
      %v764 = vsel %vm396, %v756, -inf
      %v765 = vsel %vm396, %v757, -inf
      %v766 = vsel %vm396, %v758, -inf
      %v767 = vsel %vm396, %v759, -inf
      %v768 = vsel %vm396, %v760, -inf
      %v769 = vmax.f32 %v764, %v768
      %v770 = vsel %vm396, %v761, -inf
      %v771 = vmax.f32 %v765, %v770
      %v772 = vsel %vm396, %v762, -inf
      %v773 = vmax.f32 %v766, %v772
      %v774 = vsel %vm396, %v763, -inf
      %v775 = vmax.f32 %v767, %v774
      %v776 = vmax.f32 %v769, %v771
      %v777 = vmax.f32 %v773, %v775
      %v778 = vmax.f32 %v776, %v777
      %v779 = vrot.slane %v778, 4
      %v780 = vmax.f32 %v778, %v779
      %v781 = vrot.slane %v780, 2
      %v782 = vmax.f32 %v780, %v781
      %v783 = vrot.slane %v782, 1
      %v784 = vmax.f32 %v782, %v783
      %v785 = vsub.f32 %v756, %v784
      %v786 = vsub.f32 %v757, %v784
      %v787 = vsub.f32 %v758, %v784
      %v788 = vsub.f32 %v759, %v784
      %v789 = vsub.f32 %v760, %v784
      %v790 = vsub.f32 %v761, %v784
      %v791 = vsub.f32 %v762, %v784
      %v792 = vsub.f32 %v763, %v784
      %v793 = vmul.f32 %v785, 1.442695
      %v794 = vpow.pop %v793
      %v795 = vmul.f32 %v786, 1.442695
      %v796 = vpow.pop %v795
      %v797 = vmul.f32 %v787, 1.442695
      %v798 = vpow.pop %v797
      %v799 = vmul.f32 %v788, 1.442695
      %v800 = vpow.pop %v799
      %v801 = vmul.f32 %v789, 1.442695
      %v802 = vpow.pop %v801
      %v803 = vmul.f32 %v790, 1.442695
      %v804 = vpow.pop %v803
      %v805 = vmul.f32 %v791, 1.442695
      %v806 = vpow.pop %v805
      %v807 = vmul.f32 %v792, 1.442695
      %v808 = vpow.pop %v807
      %v809 = vsel %vm396, %v794, 0.0
      %v810 = vsel %vm396, %v796, 0.0
      %v811 = vadd.f32 %v809, %v810
      %v812 = vsel %vm396, %v798, 0.0
      %v813 = vadd.f32 %v811, %v812
      %v814 = vsel %vm396, %v800, 0.0
      %v815 = vadd.f32 %v813, %v814
      %v816 = vsel %vm396, %v802, 0.0
      %v817 = vadd.f32 %v815, %v816
      %v818 = vsel %vm396, %v804, 0.0
      %v819 = vadd.f32 %v817, %v818
      %v820 = vsel %vm396, %v806, 0.0
      %v821 = vadd.f32 %v819, %v820
      %v822 = vsel %vm396, %v808, 0.0
      %v823 = vadd.f32 %v821, %v822
      %v824 = vrot.slane %v823, 4
      %v825 = vadd.f32 %v823, %v824
      %v826 = vrot.slane %v825, 2
      %v827 = vadd.f32 %v825, %v826
      %v828 = vrot.slane %v827, 1
      %v829 = vadd.f32 %v827, %v828
      %v830 = vpack.c.bf16 %v796, %v794
      %v831 = vpack.c.bf16 %v800, %v798
      %v832 = vpack.c.bf16 %v804, %v802
      %v833 = vpack.c.bf16 %v808, %v806
      %v835 = vsel %vm467, %v260, 0
      %837 = vmatprep.subr.bf16.mxu0 0
      %838 = vmatpush1.bf16.msra.mxu0 %v830
      %839 = vmatprep.subr.bf16.mxu0 0
      %840 = vmatpush1.bf16.msra.mxu0 %v831
      %841 = vmatprep.subr.bf16.mxu0 0
      %842 = vmatpush1.bf16.msra.mxu0 %v832
      %843 = vmatprep.subr.bf16.mxu0 0
      %844 = vmatpush1.bf16.msra.mxu0 %v833
      %845 = vmatprep.subr.bf16.mxu0 0
      %846 = vmatpush1.bf16.msra.mxu0 0
      %847 = vmatprep.subr.bf16.mxu0 0
      %848 = vmatpush1.bf16.msra.mxu0 0
      %849 = vmatprep.subr.bf16.mxu0 0
      %850 = vmatpush1.bf16.msra.mxu0 0
      %851 = vmatprep.subr.bf16.mxu0 0
      %852 = vmatpush1.bf16.msra.mxu0 0
      %853 = vmatprep.subr.bf16.mxu0 0
      %854 = vmatpush1.bf16.msra.mxu0 0
      %855 = vmatprep.subr.bf16.mxu0 0
      %856 = vmatpush1.bf16.msra.mxu0 0
      %857 = vmatprep.subr.bf16.mxu0 0
      %858 = vmatpush1.bf16.msra.mxu0 0
      %859 = vmatprep.subr.bf16.mxu0 0
      %860 = vmatpush1.bf16.msra.mxu0 0
      %861 = vmatprep.subr.bf16.mxu0 0
      %862 = vmatpush1.bf16.msra.mxu0 0
      %863 = vmatprep.subr.bf16.mxu0 0
      %864 = vmatpush1.bf16.msra.mxu0 0
      %865 = vmatprep.subr.bf16.mxu0 0
      %866 = vmatpush1.bf16.msra.mxu0 0
      %867 = vmatprep.subr.bf16.mxu0 0
      %868 = vmatpush1.bf16.msra.mxu0 0
      %869 = vmatprep.mubr.bf16.mxu0 0
      %870 = vmatmul.mubr.bf16.gmra.mrb[0].mxu0 %v835
      %v871 = vpop.f32.mrb[0].mxu0
      %v872 = vadd.f32 0.0, %v871
      %v873 = vpop.f32.mrb[0].mxu0
      %v874 = vpop.f32.mrb[0].mxu0
      %v875 = vpop.f32.mrb[0].mxu0
      %876 = vdwg.mxu0
      %v877 = vrcp.pop %v829
      %v878 = vmul.f32 %v872, %v877
      %879 = vset.pattern.permute.xlu0 3
      %880 = vperm.xlu0 %879, %v249
      %v881 = vpop.permute.xlu0 %880
      %883 = vset.pattern.permute.xlu0 3
      %884 = vperm.xlu0 %883, %v250
      %v885 = vpop.permute.xlu0 %884
      %887 = vset.pattern.permute.xlu0 3
      %888 = vperm.xlu0 %887, %v251
      %v889 = vpop.permute.xlu0 %888
      %891 = vset.pattern.permute.xlu0 3
      %892 = vperm.xlu0 %891, %v252
      %v893 = vpop.permute.xlu0 %892
      %895 = vset.pattern.permute.xlu0 3
      %896 = vperm.xlu0 %895, %v253
      %v897 = vpop.permute.xlu0 %896
      %899 = vset.pattern.permute.xlu0 3
      %900 = vperm.xlu0 %899, %v254
      %v901 = vpop.permute.xlu0 %900
      %903 = vset.pattern.permute.xlu0 3
      %904 = vperm.xlu0 %903, %v255
      %v905 = vpop.permute.xlu0 %904
      %907 = vset.pattern.permute.xlu0 3
      %908 = vperm.xlu0 %907, %v256
      %v909 = vpop.permute.xlu0 %908
      %v911 = vlaneseq
      %v912 = vshrl.u32 %v911, 7
      %v913 = vsub.s32 3, %v912
      %v914 = vrot.slane %v257, %v913
      %v915 = vadd.f32 %v881, %v914
      %v916 = vadd.f32 %v885, %v914
      %v917 = vadd.f32 %v889, %v914
      %v918 = vadd.f32 %v893, %v914
      %v919 = vadd.f32 %v897, %v914
      %v920 = vadd.f32 %v901, %v914
      %v921 = vadd.f32 %v905, %v914
      %v922 = vadd.f32 %v909, %v914
      %v923 = vmul.f32 %v915, 0.2
      %v924 = vmul.f32 %v916, 0.2
      %v925 = vmul.f32 %v917, 0.2
      %v926 = vmul.f32 %v918, 0.2
      %v927 = vmul.f32 %v919, 0.2
      %v928 = vmul.f32 %v920, 0.2
      %v929 = vmul.f32 %v921, 0.2
      %v930 = vmul.f32 %v922, 0.2
      %v931 = vmax.f32 %v915, %v923
      %v932 = vmax.f32 %v916, %v924
      %v933 = vmax.f32 %v917, %v925
      %v934 = vmax.f32 %v918, %v926
      %v935 = vmax.f32 %v919, %v927
      %v936 = vmax.f32 %v920, %v928
      %v937 = vmax.f32 %v921, %v929
      %v938 = vmax.f32 %v922, %v930
      %v939 = vsel %vm380, %v931, -1e+30
      %v940 = vsel %vm381, %v932, -1e+30
      %v941 = vsel %vm382, %v933, -1e+30
      %v942 = vsel %vm383, %v934, -1e+30
      %v943 = vsel %vm384, %v935, -1e+30
      %v944 = vsel %vm385, %v936, -1e+30
      %v945 = vsel %vm386, %v937, -1e+30
      %v946 = vsel %vm387, %v938, -1e+30
      %v947 = vsel %vm396, %v939, -inf
      %v948 = vsel %vm396, %v940, -inf
      %v949 = vsel %vm396, %v941, -inf
      %v950 = vsel %vm396, %v942, -inf
      %v951 = vsel %vm396, %v943, -inf
      %v952 = vmax.f32 %v947, %v951
      %v953 = vsel %vm396, %v944, -inf
      %v954 = vmax.f32 %v948, %v953
      %v955 = vsel %vm396, %v945, -inf
      %v956 = vmax.f32 %v949, %v955
      %v957 = vsel %vm396, %v946, -inf
      %v958 = vmax.f32 %v950, %v957
      %v959 = vmax.f32 %v952, %v954
      %v960 = vmax.f32 %v956, %v958
      %v961 = vmax.f32 %v959, %v960
      %v962 = vrot.slane %v961, 4
      %v963 = vmax.f32 %v961, %v962
      %v964 = vrot.slane %v963, 2
      %v965 = vmax.f32 %v963, %v964
      %v966 = vrot.slane %v965, 1
      %v967 = vmax.f32 %v965, %v966
      %v968 = vsub.f32 %v939, %v967
      %v969 = vsub.f32 %v940, %v967
      %v970 = vsub.f32 %v941, %v967
      %v971 = vsub.f32 %v942, %v967
      %v972 = vsub.f32 %v943, %v967
      %v973 = vsub.f32 %v944, %v967
      %v974 = vsub.f32 %v945, %v967
      %v975 = vsub.f32 %v946, %v967
      %v976 = vmul.f32 %v968, 1.442695
      %v977 = vpow.pop %v976
      %v978 = vmul.f32 %v969, 1.442695
      %v979 = vpow.pop %v978
      %v980 = vmul.f32 %v970, 1.442695
      %v981 = vpow.pop %v980
      %v982 = vmul.f32 %v971, 1.442695
      %v983 = vpow.pop %v982
      %v984 = vmul.f32 %v972, 1.442695
      %v985 = vpow.pop %v984
      %v986 = vmul.f32 %v973, 1.442695
      %v987 = vpow.pop %v986
      %v988 = vmul.f32 %v974, 1.442695
      %v989 = vpow.pop %v988
      %v990 = vmul.f32 %v975, 1.442695
      %v991 = vpow.pop %v990
      %v992 = vsel %vm396, %v977, 0.0
      %v993 = vsel %vm396, %v979, 0.0
      %v994 = vadd.f32 %v992, %v993
      %v995 = vsel %vm396, %v981, 0.0
      %v996 = vadd.f32 %v994, %v995
      %v997 = vsel %vm396, %v983, 0.0
      %v998 = vadd.f32 %v996, %v997
      %v999 = vsel %vm396, %v985, 0.0
      %v1000 = vadd.f32 %v998, %v999
      %v1001 = vsel %vm396, %v987, 0.0
      %v1002 = vadd.f32 %v1000, %v1001
      %v1003 = vsel %vm396, %v989, 0.0
      %v1004 = vadd.f32 %v1002, %v1003
      %v1005 = vsel %vm396, %v991, 0.0
      %v1006 = vadd.f32 %v1004, %v1005
      %v1007 = vrot.slane %v1006, 4
      %v1008 = vadd.f32 %v1006, %v1007
      %v1009 = vrot.slane %v1008, 2
      %v1010 = vadd.f32 %v1008, %v1009
      %v1011 = vrot.slane %v1010, 1
      %v1012 = vadd.f32 %v1010, %v1011
      %v1013 = vpack.c.bf16 %v979, %v977
      %v1014 = vpack.c.bf16 %v983, %v981
      %v1015 = vpack.c.bf16 %v987, %v985
      %v1016 = vpack.c.bf16 %v991, %v989
      %v1018 = vsel %vm467, %v261, 0
      %1020 = vmatprep.subr.bf16.mxu0 0
      %1021 = vmatpush1.bf16.msra.mxu0 %v1013
      %1022 = vmatprep.subr.bf16.mxu0 0
      %1023 = vmatpush1.bf16.msra.mxu0 %v1014
      %1024 = vmatprep.subr.bf16.mxu0 0
      %1025 = vmatpush1.bf16.msra.mxu0 %v1015
      %1026 = vmatprep.subr.bf16.mxu0 0
      %1027 = vmatpush1.bf16.msra.mxu0 %v1016
      %1028 = vmatprep.subr.bf16.mxu0 0
      %1029 = vmatpush1.bf16.msra.mxu0 0
      %1030 = vmatprep.subr.bf16.mxu0 0
      %1031 = vmatpush1.bf16.msra.mxu0 0
      %1032 = vmatprep.subr.bf16.mxu0 0
      %1033 = vmatpush1.bf16.msra.mxu0 0
      %1034 = vmatprep.subr.bf16.mxu0 0
      %1035 = vmatpush1.bf16.msra.mxu0 0
      %1036 = vmatprep.subr.bf16.mxu0 0
      %1037 = vmatpush1.bf16.msra.mxu0 0
      %1038 = vmatprep.subr.bf16.mxu0 0
      %1039 = vmatpush1.bf16.msra.mxu0 0
      %1040 = vmatprep.subr.bf16.mxu0 0
      %1041 = vmatpush1.bf16.msra.mxu0 0
      %1042 = vmatprep.subr.bf16.mxu0 0
      %1043 = vmatpush1.bf16.msra.mxu0 0
      %1044 = vmatprep.subr.bf16.mxu0 0
      %1045 = vmatpush1.bf16.msra.mxu0 0
      %1046 = vmatprep.subr.bf16.mxu0 0
      %1047 = vmatpush1.bf16.msra.mxu0 0
      %1048 = vmatprep.subr.bf16.mxu0 0
      %1049 = vmatpush1.bf16.msra.mxu0 0
      %1050 = vmatprep.subr.bf16.mxu0 0
      %1051 = vmatpush1.bf16.msra.mxu0 0
      %1052 = vmatprep.mubr.bf16.mxu0 0
      %1053 = vmatmul.mubr.bf16.gmra.mrb[0].mxu0 %v1018
      %v1054 = vpop.f32.mrb[0].mxu0
      %v1055 = vadd.f32 0.0, %v1054
      %v1056 = vpop.f32.mrb[0].mxu0
      %v1057 = vpop.f32.mrb[0].mxu0
      %v1058 = vpop.f32.mrb[0].mxu0
      %1059 = vdwg.mxu0
      %v1060 = vrcp.pop %v1012
      %v1061 = vmul.f32 %v1055, %v1060
      %v1062 = vld [vmem:[%s4] sm:$0xff]
      %v1063 = vld [vmem:[%s4 + $0x8] sm:$0xff]
      %v1064 = vld [vmem:[%s4 + $0x10] sm:$0xff]
      %v1065 = vld [vmem:[%s4 + $0x18] sm:$0xff]
      %1067 = vset.pattern.permute.xlu0 0
      %1068 = vperm.xlu0 %1067, %v1062
      %v1069 = vpop.permute.xlu0 %1068
      %1072 = vset.pattern.permute.xlu0 0
      %1073 = vperm.xlu0 %1072, %v1063
      %v1074 = vpop.permute.xlu0 %1073
      %1077 = vset.pattern.permute.xlu0 0
      %1078 = vperm.xlu0 %1077, %v1064
      %v1079 = vpop.permute.xlu0 %1078
      %1082 = vset.pattern.permute.xlu0 0
      %1083 = vperm.xlu0 %1082, %v1065
      %v1084 = vpop.permute.xlu0 %1083
      %v1086 = vadd.f32 %v512, %v1069
      %v1087 = vadd.f32 %v695, %v1074
      %v1088 = vadd.f32 %v878, %v1079
      %v1089 = vadd.f32 %v1061, %v1084
      %vm1090 = vcmp.gt.f32.partialorder %v1086, 0.0
      %vm1091 = vcmp.gt.f32.partialorder %v1087, 0.0
      %vm1092 = vcmp.gt.f32.partialorder %v1088, 0.0
      %vm1093 = vcmp.gt.f32.partialorder %v1089, 0.0
      %v1094 = vmin.f32 %v1086, 0.0
      %v1095 = vmin.f32 %v1087, 0.0
      %v1096 = vmin.f32 %v1088, 0.0
      %v1097 = vmin.f32 %v1089, 0.0
      %v1098 = vmul.f32 %v1094, 1.442695
      %v1099 = vpow.pop %v1098
      %v1100 = vmul.f32 %v1095, 1.442695
      %v1101 = vpow.pop %v1100
      %v1102 = vmul.f32 %v1096, 1.442695
      %v1103 = vpow.pop %v1102
      %v1104 = vmul.f32 %v1097, 1.442695
      %v1105 = vpow.pop %v1104
      %v1106 = vsub.f32 %v1099, 1.0
      %v1107 = vsub.f32 %v1101, 1.0
      %v1108 = vsub.f32 %v1103, 1.0
      %v1109 = vsub.f32 %v1105, 1.0
      %v1110 = vsel %vm1090, %v1086, %v1106
      %v1111 = vsel %vm1091, %v1087, %v1107
      %v1112 = vsel %vm1092, %v1088, %v1108
      %v1113 = vsel %vm1093, %v1089, %v1109
      %1114 = vst.msk [vmem:[%s241] sm:$0xff] %vm396, %v1110
      %1115 = vst.msk [vmem:[%s241 + $0x8] sm:$0xff] %vm396, %v1111
      %1116 = vst.msk [vmem:[%s241 + $0x10] sm:$0xff] %vm396, %v1112
      %1117 = vst.msk [vmem:[%s241 + $0x18] sm:$0xff] %vm396, %v1113
      %p1118 = scmp.lt.s32.totalorder %s16, 1
      %s1119 = scalar_select %p1118, %s16, 1
      %s1120 = smul.addr %s1119, 4
      %s1121 = smul.addr %s1120, 8
      %s1122 = scalar_lea.vmem %s5, %s1121
      // Predicated region
      $region41: #{_lambda_.5} parent=39 // pred_check
        %p1123 = pneg %p149
      $region42: #{_lambda_.5} parent=39 // pred_check_branch
        %1125 = sbr.rel (%p1123) target = $region44
      $region43: #{_lambda_.5} parent=39 // pred_region
        _
      $region44: #{_lambda_.5} parent=39 // pred_fallthru
        _
    $region40: #{_lambda_.5} parent=5 // pred_fallthru
      _
    %p1126 = scmp.le.s32.totalorder 2, %s11
    // Predicated region
    $region45: #{_lambda_.5} parent=5 // pred_check
      %p1127 = pneg %p1126
    $region46: #{_lambda_.5} parent=5 // pred_check_branch
      %1129 = sbr.rel (%p1127) target = $region48
    $region47: #{_lambda_.5} parent=5 // pred_region
      %s1130 = ssub.s32 %s11, 2
      // Predicated region
      $region49: #{_lambda_.5} parent=47 // pred_check
        %p1131 = pneg %p155
      $region50: #{_lambda_.5} parent=47 // pred_check_branch
        %1133 = sbr.rel (%p1131) target = $region52
      $region51: #{_lambda_.5} parent=47 // pred_region
        %p1134 = scmp.lt.s32.totalorder %s17, 1
        %s1135 = scalar_select %p1134, %s17, 1
        %s1136 = smul.addr %s1135, 4
        %s1137 = smul.addr %s1136, 8
        %s1138 = scalar_lea.vmem %s5, %s1137
      $region52: #{_lambda_.5} parent=47 // pred_fallthru
        _
    $region48: #{_lambda_.5} parent=5 // pred_fallthru
      _
  $region6: #{_lambda_.5} parent=0 // loop_footer
    %s15 = sadd.s32 1, %s11
  $region7: #{_lambda_.5} parent=0 // loop_footer_branch
    %10 = sbr.rel target = $region3
  $region8: #{_lambda_.5} parent=0 // loop_exit
    _

// kernel: _lambda_.7
$region0: #{_lambda_.7}
  #allocation0 [shape = 'u32[]', space=smem, size = 0x4, offset = 0x4, fixed_abs, tag = 'smem constant byte address 0x4 - core index']
  #allocation1 [shape = 'u32[144,128]{1,0:T(1,128)}', space=vmem, size = 0x12000, scoped, tag = 'internal scratch']
  %s0 = inlined_call_operand.vmem [shape: f32[64,1], index: 0, kind: input, shape index: {}]
  %s1 = inlined_call_operand.vmem [shape: bf16[8,64], index: 1, kind: input, shape index: {}]
  %s2 = inlined_call_operand.vmem [shape: s8[2,64,32], index: 2, kind: input, shape index: {}]
  %s3 = inlined_call_operand.vmem [shape: f32[2,1,32], index: 3, kind: input, shape index: {}]
  %s4 = inlined_call_operand.vmem [shape: f32[8,1], index: 4, kind: input, shape index: {}]
  %s5 = inlined_call_operand.vmem [shape: f32[2,8,32], index: 5, kind: output, shape index: {}]
  %s6 = sld [smem:[#allocation0]]
  $region53: #{_lambda_.7} parent=0
    _
  %s8 = ssub.s32 1, %s6
  %s9 = scalar_select 0, %s8, %s6
  loop: start=0, step=1, limit=4
  $region2: #{_lambda_.7} parent=0 // loop_pre_header
    _
  $region3: #{_lambda_.7} parent=0 // loop_header
    %s11 = sphi 0, %s15
    %p12 = scmp.ge.s32.totalorder %s11, 4
    %s19 = sphi 0, %s19
    %s21 = sphi 0, %s19
    %s22 = sphi 0, %s21
    %s36 = sphi 0, %s22
    %s40 = sphi 0, %s40
    %s42 = sphi 0, %s40
    %s43 = sphi 0, %s42
    %s57 = sphi 0, %s43
    %s63 = sphi 0, %s65
    %s66 = sphi 0, %s63
    %s67 = sphi 0, %s66
    %s83 = sphi 0, %s67
    %s89 = sphi 0, %s91
    %s92 = sphi 0, %s89
    %s93 = sphi 0, %s92
    %s109 = sphi 0, %s93
    %s113 = sphi 0, %s113
    %s115 = sphi 0, %s113
    %s116 = sphi 0, %s115
    %s130 = sphi 0, %s116
    %s136 = sphi 0, %s138
    %s139 = sphi 0, %s136
    %s140 = sphi 0, %s139
    %s156 = sphi 0, %s140
  $region4: #{_lambda_.7} parent=0 // loop_header_branch
    %14 = sbr.rel (%p12) target = $region8
  $region5: #{_lambda_.7} parent=0 // loop_body
    %s16 = ssub.s32 %s11, 1
    %s17 = ssub.s32 %s11, 2
    %s18 = sadd.s32 %s11, 1
    %s20 = sadd.s32 %s19, 1
    %p23 = scmp.eq.s32.totalorder %s11, 1
    %p24 = scmp.ne.s32.totalorder %s19, %s21
    %p25 = scmp.eq.s32.totalorder %s11, 0
    %p26 = por %p24, %p25
    %p27 = scmp.ne.s32.totalorder %s19, %s21
    %p28 = scmp.eq.s32.totalorder %s16, 1
    %p29 = por %p27, %p28
    %p30 = scmp.ne.s32.totalorder %s21, %s22
    %p31 = scmp.eq.s32.totalorder %s16, 0
    %p32 = por %p30, %p31
    %p33 = scmp.ne.s32.totalorder %s21, %s22
    %p34 = scmp.eq.s32.totalorder %s17, 1
    %p35 = por %p33, %p34
    %p37 = scmp.ne.s32.totalorder %s22, %s36
    %p38 = scmp.eq.s32.totalorder %s17, 0
    %p39 = por %p37, %p38
    %s41 = sadd.s32 %s40, 1
    %p44 = scmp.eq.s32.totalorder %s11, 1
    %p45 = scmp.ne.s32.totalorder %s40, %s42
    %p46 = scmp.eq.s32.totalorder %s11, 0
    %p47 = por %p45, %p46
    %p48 = scmp.ne.s32.totalorder %s40, %s42
    %p49 = scmp.eq.s32.totalorder %s16, 1
    %p50 = por %p48, %p49
    %p51 = scmp.ne.s32.totalorder %s42, %s43
    %p52 = scmp.eq.s32.totalorder %s16, 0
    %p53 = por %p51, %p52
    %p54 = scmp.ne.s32.totalorder %s42, %s43
    %p55 = scmp.eq.s32.totalorder %s17, 1
    %p56 = por %p54, %p55
    %p58 = scmp.ne.s32.totalorder %s43, %s57
    %p59 = scmp.eq.s32.totalorder %s17, 0
    %p60 = por %p58, %p59
    %s61 = ssub.s32 %s11, %s18
    %p62 = scmp.eq.s32.totalorder %s61, 0
    %s64 = sadd.s32 %s63, 1
    %s65 = scalar_select %p62, %s63, %s64
    %p68 = pneg %p62
    %p69 = scmp.eq.s32.totalorder %s11, 1
    %p70 = por %p68, %p69
    %p71 = scmp.ne.s32.totalorder %s63, %s66
    %p72 = scmp.eq.s32.totalorder %s11, 0
    %p73 = por %p71, %p72
    %p74 = scmp.ne.s32.totalorder %s63, %s66
    %p75 = scmp.eq.s32.totalorder %s16, 1
    %p76 = por %p74, %p75
    %p77 = scmp.ne.s32.totalorder %s66, %s67
    %p78 = scmp.eq.s32.totalorder %s16, 0
    %p79 = por %p77, %p78
    %p80 = scmp.ne.s32.totalorder %s66, %s67
    %p81 = scmp.eq.s32.totalorder %s17, 1
    %p82 = por %p80, %p81
    %p84 = scmp.ne.s32.totalorder %s67, %s83
    %p85 = scmp.eq.s32.totalorder %s17, 0
    %p86 = por %p84, %p85
    %s87 = ssub.s32 %s11, %s18
    %p88 = scmp.eq.s32.totalorder %s87, 0
    %s90 = sadd.s32 %s89, 1
    %s91 = scalar_select %p88, %s89, %s90
    %p94 = pneg %p88
    %p95 = scmp.eq.s32.totalorder %s11, 1
    %p96 = por %p94, %p95
    %p97 = scmp.ne.s32.totalorder %s89, %s92
    %p98 = scmp.eq.s32.totalorder %s11, 0
    %p99 = por %p97, %p98
    %p100 = scmp.ne.s32.totalorder %s89, %s92
    %p101 = scmp.eq.s32.totalorder %s16, 1
    %p102 = por %p100, %p101
    %p103 = scmp.ne.s32.totalorder %s92, %s93
    %p104 = scmp.eq.s32.totalorder %s16, 0
    %p105 = por %p103, %p104
    %p106 = scmp.ne.s32.totalorder %s92, %s93
    %p107 = scmp.eq.s32.totalorder %s17, 1
    %p108 = por %p106, %p107
    %p110 = scmp.ne.s32.totalorder %s93, %s109
    %p111 = scmp.eq.s32.totalorder %s17, 0
    %p112 = por %p110, %p111
    %s114 = sadd.s32 %s113, 1
    %p117 = scmp.eq.s32.totalorder %s11, 1
    %p118 = scmp.ne.s32.totalorder %s113, %s115
    %p119 = scmp.eq.s32.totalorder %s11, 0
    %p120 = por %p118, %p119
    %p121 = scmp.ne.s32.totalorder %s113, %s115
    %p122 = scmp.eq.s32.totalorder %s16, 1
    %p123 = por %p121, %p122
    %p124 = scmp.ne.s32.totalorder %s115, %s116
    %p125 = scmp.eq.s32.totalorder %s16, 0
    %p126 = por %p124, %p125
    %p127 = scmp.ne.s32.totalorder %s115, %s116
    %p128 = scmp.eq.s32.totalorder %s17, 1
    %p129 = por %p127, %p128
    %p131 = scmp.ne.s32.totalorder %s116, %s130
    %p132 = scmp.eq.s32.totalorder %s17, 0
    %p133 = por %p131, %p132
    %s134 = ssub.s32 %s11, %s18
    %p135 = scmp.eq.s32.totalorder %s134, 0
    %s137 = sadd.s32 %s136, 1
    %s138 = scalar_select %p135, %s136, %s137
    %p141 = pneg %p135
    %p142 = scmp.eq.s32.totalorder %s11, 1
    %p143 = por %p141, %p142
    %p144 = scmp.ne.s32.totalorder %s136, %s139
    %p145 = scmp.eq.s32.totalorder %s11, 0
    %p146 = por %p144, %p145
    %p147 = scmp.ne.s32.totalorder %s136, %s139
    %p148 = scmp.eq.s32.totalorder %s16, 1
    %p149 = por %p147, %p148
    %p150 = scmp.ne.s32.totalorder %s139, %s140
    %p151 = scmp.eq.s32.totalorder %s16, 0
    %p152 = por %p150, %p151
    %p153 = scmp.ne.s32.totalorder %s139, %s140
    %p154 = scmp.eq.s32.totalorder %s17, 1
    %p155 = por %p153, %p154
    %p157 = scmp.ne.s32.totalorder %s140, %s156
    %p158 = scmp.eq.s32.totalorder %s17, 0
    %p159 = por %p157, %p158
    %p160 = scmp.le.s32.totalorder 1, %s11
    %p161 = scmp.lt.s32.totalorder %s11, 3
    %p162 = pnand %p160, %p161
    %p163 = pneg %p162
    // Predicated region
    $region9: #{_lambda_.7} parent=5 // pred_check
      _
    $region10: #{_lambda_.7} parent=5 // pred_check_branch
      %165 = sbr.rel (%p162) target = $region12
    $region11: #{_lambda_.7} parent=5 // pred_region
      %s166 = ssub.s32 %s11, 1
      // Predicated region
      $region13: #{_lambda_.7} parent=11 // pred_check
        %p167 = pneg %p32
      $region14: #{_lambda_.7} parent=11 // pred_check_branch
        %169 = sbr.rel (%p167) target = $region16
      $region15: #{_lambda_.7} parent=11 // pred_region
        _
      $region16: #{_lambda_.7} parent=11 // pred_fallthru
        _
      // Predicated region
      $region17: #{_lambda_.7} parent=11 // pred_check
        %p170 = pneg %p53
      $region18: #{_lambda_.7} parent=11 // pred_check_branch
        %172 = sbr.rel (%p170) target = $region20
      $region19: #{_lambda_.7} parent=11 // pred_region
        _
      $region20: #{_lambda_.7} parent=11 // pred_fallthru
        _
      // Predicated region
      $region21: #{_lambda_.7} parent=11 // pred_check
        %p173 = pneg %p126
      $region22: #{_lambda_.7} parent=11 // pred_check_branch
        %175 = sbr.rel (%p173) target = $region24
      $region23: #{_lambda_.7} parent=11 // pred_region
        _
      $region24: #{_lambda_.7} parent=11 // pred_fallthru
        _
    $region12: #{_lambda_.7} parent=5 // pred_fallthru
      _
    %p176 = scmp.lt.s32.totalorder %s11, 2
    // Predicated region
    $region25: #{_lambda_.7} parent=5 // pred_check
      %p177 = pneg %p176
    $region26: #{_lambda_.7} parent=5 // pred_check_branch
      %179 = sbr.rel (%p177) target = $region28
    $region27: #{_lambda_.7} parent=5 // pred_region
      // Predicated region
      $region29: #{_lambda_.7} parent=27 // pred_check
        %p180 = pneg %p73
      $region30: #{_lambda_.7} parent=27 // pred_check_branch
        %182 = sbr.rel (%p180) target = $region32
      $region31: #{_lambda_.7} parent=27 // pred_region
        %p183 = scmp.lt.s32.totalorder %s11, 1
        %s184 = scalar_select %p183, %s11, 1
        %s185 = smul.addr %s184, 2
        %s186 = smul.addr %s185, 8
        %s187 = scalar_lea.vmem %s2, %s186
      $region32: #{_lambda_.7} parent=27 // pred_fallthru
        _
      // Predicated region
      $region33: #{_lambda_.7} parent=27 // pred_check
        %p188 = pneg %p99
      $region34: #{_lambda_.7} parent=27 // pred_check_branch
        %190 = sbr.rel (%p188) target = $region36
      $region35: #{_lambda_.7} parent=27 // pred_region
        %p191 = scmp.lt.s32.totalorder %s11, 1
        %s192 = scalar_select %p191, %s11, 1
        %s193 = scalar_lea.vmem %s3, %s192
      $region36: #{_lambda_.7} parent=27 // pred_fallthru
        _
    $region28: #{_lambda_.7} parent=5 // pred_fallthru
      _
    %p194 = scmp.le.s32.totalorder 1, %s11
    %p195 = scmp.lt.s32.totalorder %s11, 3
    %p196 = pnand %p194, %p195
    %p197 = pneg %p196
    // Predicated region
    $region37: #{_lambda_.7} parent=5 // pred_check
      _
    $region38: #{_lambda_.7} parent=5 // pred_check_branch
      %199 = sbr.rel (%p196) target = $region40
    $region39: #{_lambda_.7} parent=5 // pred_region
      %s200 = ssub.s32 %s11, 1
      %p201 = pneg %p32
      %p202 = pneg %p29
      %p203 = pneg %p53
      %p204 = pneg %p50
      %p205 = scmp.lt.s32.totalorder %s16, 1
      %s206 = scalar_select %p205, %s16, 1
      %s207 = smul.addr %s206, 2
      %s208 = smul.addr %s207, 8
      %s209 = scalar_lea.vmem %s2, %s208
      %p210 = pneg %p79
      %p211 = pneg %p76
      %p212 = scmp.lt.s32.totalorder %s16, 1
      %s213 = scalar_select %p212, %s16, 1
      %s214 = scalar_lea.vmem %s3, %s213
      %p215 = pneg %p105
      %p216 = pneg %p102
      %p217 = pneg %p126
      %p218 = pneg %p123
      %p219 = pneg %p152
      %p220 = pneg %p149
      %p221 = scmp.lt.s32.totalorder %s16, 1
      %s222 = scalar_select %p221, %s16, 1
      %s223 = smul.addr %s222, 8
      %s224 = scalar_lea.vmem %s5, %s223
      %p225 = scmp.lt.s32.totalorder %s16, 1
      %s226 = scalar_select %p225, %s16, 1
      %s227 = smul.addr %s226, 2
      %s228 = smul.addr %s227, 8
      %s229 = scalar_lea.vmem %s2, %s228
      %p230 = scmp.lt.s32.totalorder %s16, 1
      %s231 = scalar_select %p230, %s16, 1
      %s232 = scalar_lea.vmem %s3, %s231
      %p233 = scmp.lt.s32.totalorder %s16, 1
      %s234 = scalar_select %p233, %s16, 1
      %s235 = smul.addr %s234, 8
      %s236 = scalar_lea.vmem %s5, %s235
      %v240 = vld [vmem:[%s229] sm:$0xff]
      %v241 = vld [vmem:[%s229 + $0x8] sm:$0xff]
      %vm242 = vnez %v240
      %vm243 = vnez %v241
      %v244 = vld [vmem:[%s0] sm:$0xff]
      %v245 = vld [vmem:[%s0 + $0x8] sm:$0xff]
      %v246 = vld [vmem:[%s0 + $0x10] sm:$0xff]
      %v247 = vld [vmem:[%s0 + $0x18] sm:$0xff]
      %v248 = vld [vmem:[%s0 + $0x20] sm:$0xff]
      %v249 = vld [vmem:[%s0 + $0x28] sm:$0xff]
      %v250 = vld [vmem:[%s0 + $0x30] sm:$0xff]
      %v251 = vld [vmem:[%s0 + $0x38] sm:$0xff]
      %v252 = vld [vmem:[%s232] sm:$0x1]
      %v253 = vld [vmem:[%s1] sm:$0xf]
      %255 = vset.pattern.permute.xlu0 0
      %256 = vperm.xlu0 %255, %v244
      %v257 = vpop.permute.xlu0 %256
      %260 = vset.pattern.permute.xlu0 0
      %261 = vperm.xlu0 %260, %v245
      %v262 = vpop.permute.xlu0 %261
      %265 = vset.pattern.permute.xlu0 0
      %266 = vperm.xlu0 %265, %v246
      %v267 = vpop.permute.xlu0 %266
      %270 = vset.pattern.permute.xlu0 0
      %271 = vperm.xlu0 %270, %v247
      %v272 = vpop.permute.xlu0 %271
      %275 = vset.pattern.permute.xlu0 0
      %276 = vperm.xlu0 %275, %v248
      %v277 = vpop.permute.xlu0 %276
      %280 = vset.pattern.permute.xlu0 0
      %281 = vperm.xlu0 %280, %v249
      %v282 = vpop.permute.xlu0 %281
      %285 = vset.pattern.permute.xlu0 0
      %286 = vperm.xlu0 %285, %v250
      %v287 = vpop.permute.xlu0 %286
      %290 = vset.pattern.permute.xlu0 0
      %291 = vperm.xlu0 %290, %v251
      %v292 = vpop.permute.xlu0 %291
      %v295 = vlaneseq
      %v296 = vshrl.u32 %v295, 7
      %v297 = vsub.s32 0, %v296
      %v298 = vrot.slane %v252, %v297
      %v300 = vadd.f32 %v257, %v298
      %v301 = vadd.f32 %v262, %v298
      %v302 = vadd.f32 %v267, %v298
      %v303 = vadd.f32 %v272, %v298
      %v304 = vadd.f32 %v277, %v298
      %v305 = vadd.f32 %v282, %v298
      %v306 = vadd.f32 %v287, %v298
      %v307 = vadd.f32 %v292, %v298
      %v308 = vmul.f32 %v300, 0.2
      %v309 = vmul.f32 %v301, 0.2
      %v310 = vmul.f32 %v302, 0.2
      %v311 = vmul.f32 %v303, 0.2
      %v312 = vmul.f32 %v304, 0.2
      %v313 = vmul.f32 %v305, 0.2
      %v314 = vmul.f32 %v306, 0.2
      %v315 = vmul.f32 %v307, 0.2
      %v316 = vmax.f32 %v300, %v308
      %v317 = vmax.f32 %v301, %v309
      %v318 = vmax.f32 %v302, %v310
      %v319 = vmax.f32 %v303, %v311
      %v320 = vmax.f32 %v304, %v312
      %v321 = vmax.f32 %v305, %v313
      %v322 = vmax.f32 %v306, %v314
      %v323 = vmax.f32 %v307, %v315
      %v324 = vsel %vm242, 16843009, 0
      %v325 = vsel %vm243, 16843009, 0
      %v326 = vunpack.c.0.s8 %v324
      %v327 = vunpack.c.1.s8 %v324
      %v328 = vunpack.c.2.s8 %v324
      %v329 = vunpack.c.3.s8 %v324
      %v330 = vunpack.c.0.s8 %v325
      %v331 = vunpack.c.1.s8 %v325
      %v332 = vunpack.c.2.s8 %v325
      %v333 = vunpack.c.3.s8 %v325
      %v334 = vpack.c.b16 %v326, %v326
      %v335 = vpack.c.b8 %v334, %v334
      %v336 = vpack.c.b16 %v327, %v327
      %v337 = vpack.c.b8 %v336, %v336
      %v338 = vpack.c.b16 %v328, %v328
      %v339 = vpack.c.b8 %v338, %v338
      %v340 = vpack.c.b16 %v329, %v329
      %v341 = vpack.c.b8 %v340, %v340
      %v342 = vpack.c.b16 %v330, %v330
      %v343 = vpack.c.b8 %v342, %v342
      %v344 = vpack.c.b16 %v331, %v331
      %v345 = vpack.c.b8 %v344, %v344
      %v346 = vpack.c.b16 %v332, %v332
      %v347 = vpack.c.b8 %v346, %v346
      %v348 = vpack.c.b16 %v333, %v333
      %v349 = vpack.c.b8 %v348, %v348
      %vm350 = vnez %v335
      %vm351 = vnez %v337
      %vm352 = vnez %v339
      %vm353 = vnez %v341
      %vm354 = vnez %v343
      %vm355 = vnez %v345
      %vm356 = vnez %v347
      %vm357 = vnez %v349
      %v358 = vsel %vm350, 16843009, 0
      %v359 = vsel %vm351, 16843009, 0
      %v360 = vsel %vm352, 16843009, 0
      %v361 = vsel %vm353, 16843009, 0
      %v362 = vsel %vm354, 16843009, 0
      %v363 = vsel %vm355, 16843009, 0
      %v364 = vsel %vm356, 16843009, 0
      %v365 = vsel %vm357, 16843009, 0
      %v366 = vunpack.c.0.s8 %v358
      %v367 = vunpack.c.0.s8 %v359
      %v368 = vunpack.c.0.s8 %v360
      %v369 = vunpack.c.0.s8 %v361
      %v370 = vunpack.c.0.s8 %v362
      %v371 = vunpack.c.0.s8 %v363
      %v372 = vunpack.c.0.s8 %v364
      %v373 = vunpack.c.0.s8 %v365
      %vm374 = vcmp.ne.s32.totalorder %v366, 0
      %vm375 = vcmp.ne.s32.totalorder %v367, 0
      %vm376 = vcmp.ne.s32.totalorder %v368, 0
      %vm377 = vcmp.ne.s32.totalorder %v369, 0
      %vm378 = vcmp.ne.s32.totalorder %v370, 0
      %vm379 = vcmp.ne.s32.totalorder %v371, 0
      %vm380 = vcmp.ne.s32.totalorder %v372, 0
      %vm381 = vcmp.ne.s32.totalorder %v373, 0
      %v382 = vsel %vm374, %v316, -1e+30
      %v383 = vsel %vm375, %v317, -1e+30
      %v384 = vsel %vm376, %v318, -1e+30
      %v385 = vsel %vm377, %v319, -1e+30
      %v386 = vsel %vm378, %v320, -1e+30
      %v387 = vsel %vm379, %v321, -1e+30
      %v388 = vsel %vm380, %v322, -1e+30
      %v389 = vsel %vm381, %v323, -1e+30
      %vm390 = vcmask 261120
      %v391 = vsel %vm390, %v382, -inf
      %v392 = vsel %vm390, %v383, -inf
      %v393 = vsel %vm390, %v384, -inf
      %v394 = vsel %vm390, %v385, -inf
      %v395 = vsel %vm390, %v386, -inf
      %v396 = vmax.f32 %v391, %v395
      %v397 = vsel %vm390, %v387, -inf
      %v398 = vmax.f32 %v392, %v397
      %v399 = vsel %vm390, %v388, -inf
      %v400 = vmax.f32 %v393, %v399
      %v401 = vsel %vm390, %v389, -inf
      %v402 = vmax.f32 %v394, %v401
      %v403 = vmax.f32 %v396, %v398
      %v404 = vmax.f32 %v400, %v402
      %v405 = vmax.f32 %v403, %v404
      %v406 = vrot.slane %v405, 4
      %v407 = vmax.f32 %v405, %v406
      %v408 = vrot.slane %v407, 2
      %v409 = vmax.f32 %v407, %v408
      %v410 = vrot.slane %v409, 1
      %v411 = vmax.f32 %v409, %v410
      %v412 = vsub.f32 %v382, %v411
      %v413 = vsub.f32 %v383, %v411
      %v414 = vsub.f32 %v384, %v411
      %v415 = vsub.f32 %v385, %v411
      %v416 = vsub.f32 %v386, %v411
      %v417 = vsub.f32 %v387, %v411
      %v418 = vsub.f32 %v388, %v411
      %v419 = vsub.f32 %v389, %v411
      %v420 = vmul.f32 %v412, 1.442695
      %v421 = vpow.pop %v420
      %v422 = vmul.f32 %v413, 1.442695
      %v423 = vpow.pop %v422
      %v424 = vmul.f32 %v414, 1.442695
      %v425 = vpow.pop %v424
      %v426 = vmul.f32 %v415, 1.442695
      %v427 = vpow.pop %v426
      %v428 = vmul.f32 %v416, 1.442695
      %v429 = vpow.pop %v428
      %v430 = vmul.f32 %v417, 1.442695
      %v431 = vpow.pop %v430
      %v432 = vmul.f32 %v418, 1.442695
      %v433 = vpow.pop %v432
      %v434 = vmul.f32 %v419, 1.442695
      %v435 = vpow.pop %v434
      %v436 = vsel %vm390, %v421, 0.0
      %v437 = vsel %vm390, %v423, 0.0
      %v438 = vadd.f32 %v436, %v437
      %v439 = vsel %vm390, %v425, 0.0
      %v440 = vadd.f32 %v438, %v439
      %v441 = vsel %vm390, %v427, 0.0
      %v442 = vadd.f32 %v440, %v441
      %v443 = vsel %vm390, %v429, 0.0
      %v444 = vadd.f32 %v442, %v443
      %v445 = vsel %vm390, %v431, 0.0
      %v446 = vadd.f32 %v444, %v445
      %v447 = vsel %vm390, %v433, 0.0
      %v448 = vadd.f32 %v446, %v447
      %v449 = vsel %vm390, %v435, 0.0
      %v450 = vadd.f32 %v448, %v449
      %v451 = vrot.slane %v450, 4
      %v452 = vadd.f32 %v450, %v451
      %v453 = vrot.slane %v452, 2
      %v454 = vadd.f32 %v452, %v453
      %v455 = vrot.slane %v454, 1
      %v456 = vadd.f32 %v454, %v455
      %v457 = vpack.c.bf16 %v423, %v421
      %v458 = vpack.c.bf16 %v427, %v425
      %v459 = vpack.c.bf16 %v431, %v429
      %v460 = vpack.c.bf16 %v435, %v433
      %vm461 = vcmask 523264
      %v463 = vsel %vm461, %v253, 0
      %465 = vmatprep.subr.bf16.mxu0 0
      %466 = vmatpush1.bf16.msra.mxu0 %v457
      %467 = vmatprep.subr.bf16.mxu0 0
      %468 = vmatpush1.bf16.msra.mxu0 %v458
      %469 = vmatprep.subr.bf16.mxu0 0
      %470 = vmatpush1.bf16.msra.mxu0 %v459
      %471 = vmatprep.subr.bf16.mxu0 0
      %472 = vmatpush1.bf16.msra.mxu0 %v460
      %473 = vmatprep.subr.bf16.mxu0 0
      %474 = vmatpush1.bf16.msra.mxu0 0
      %475 = vmatprep.subr.bf16.mxu0 0
      %476 = vmatpush1.bf16.msra.mxu0 0
      %477 = vmatprep.subr.bf16.mxu0 0
      %478 = vmatpush1.bf16.msra.mxu0 0
      %479 = vmatprep.subr.bf16.mxu0 0
      %480 = vmatpush1.bf16.msra.mxu0 0
      %481 = vmatprep.subr.bf16.mxu0 0
      %482 = vmatpush1.bf16.msra.mxu0 0
      %483 = vmatprep.subr.bf16.mxu0 0
      %484 = vmatpush1.bf16.msra.mxu0 0
      %485 = vmatprep.subr.bf16.mxu0 0
      %486 = vmatpush1.bf16.msra.mxu0 0
      %487 = vmatprep.subr.bf16.mxu0 0
      %488 = vmatpush1.bf16.msra.mxu0 0
      %489 = vmatprep.subr.bf16.mxu0 0
      %490 = vmatpush1.bf16.msra.mxu0 0
      %491 = vmatprep.subr.bf16.mxu0 0
      %492 = vmatpush1.bf16.msra.mxu0 0
      %493 = vmatprep.subr.bf16.mxu0 0
      %494 = vmatpush1.bf16.msra.mxu0 0
      %495 = vmatprep.subr.bf16.mxu0 0
      %496 = vmatpush1.bf16.msra.mxu0 0
      %497 = vmatprep.mubr.bf16.mxu0 0
      %498 = vmatmul.mubr.bf16.gmra.mrb[0].mxu0 %v463
      %v499 = vpop.f32.mrb[0].mxu0
      %v500 = vadd.f32 0.0, %v499
      %v501 = vpop.f32.mrb[0].mxu0
      %v502 = vpop.f32.mrb[0].mxu0
      %v503 = vpop.f32.mrb[0].mxu0
      %504 = vdwg.mxu0
      %v505 = vrcp.pop %v456
      %v506 = vmul.f32 %v500, %v505
      %v507 = vld [vmem:[%s4] sm:$0xff]
      %509 = vset.pattern.permute.xlu0 0
      %510 = vperm.xlu0 %509, %v507
      %v511 = vpop.permute.xlu0 %510
      %v513 = vadd.f32 %v506, %v511
      %514 = vst.msk [vmem:[%s236] sm:$0xff] %vm390, %v513
      %p515 = scmp.lt.s32.totalorder %s16, 1
      %s516 = scalar_select %p515, %s16, 1
      %s517 = smul.addr %s516, 8
      %s518 = scalar_lea.vmem %s5, %s517
      // Predicated region
      $region41: #{_lambda_.7} parent=39 // pred_check
        %p519 = pneg %p149
      $region42: #{_lambda_.7} parent=39 // pred_check_branch
        %521 = sbr.rel (%p519) target = $region44
      $region43: #{_lambda_.7} parent=39 // pred_region
        _
      $region44: #{_lambda_.7} parent=39 // pred_fallthru
        _
    $region40: #{_lambda_.7} parent=5 // pred_fallthru
      _
    %p522 = scmp.le.s32.totalorder 2, %s11
    // Predicated region
    $region45: #{_lambda_.7} parent=5 // pred_check
      %p523 = pneg %p522
    $region46: #{_lambda_.7} parent=5 // pred_check_branch
      %525 = sbr.rel (%p523) target = $region48
    $region47: #{_lambda_.7} parent=5 // pred_region
      %s526 = ssub.s32 %s11, 2
      // Predicated region
      $region49: #{_lambda_.7} parent=47 // pred_check
        %p527 = pneg %p155
      $region50: #{_lambda_.7} parent=47 // pred_check_branch
        %529 = sbr.rel (%p527) target = $region52
      $region51: #{_lambda_.7} parent=47 // pred_region
        %p530 = scmp.lt.s32.totalorder %s17, 1
        %s531 = scalar_select %p530, %s17, 1
        %s532 = smul.addr %s531, 8
        %s533 = scalar_lea.vmem %s5, %s532
      $region52: #{_lambda_.7} parent=47 // pred_fallthru
        _
    $region48: #{_lambda_.7} parent=5 // pred_fallthru
      _
  $region6: #{_lambda_.7} parent=0 // loop_footer
    %s15 = sadd.s32 1, %s11
  $region7: #{_lambda_.7} parent=0 // loop_footer_branch
    %10 = sbr.rel target = $region3
  $region8: #{_lambda_.7} parent=0 // loop_exit
    _

</llo_original>
